<compile_context>
chip_gen: v7x
topology: tpu7x:2x2x1
jax: 0.10.0
libtpu: 0.0.40
codegen_flags: <defaults>
</compile_context>

<pallas_src>
import functools
from typing import NamedTuple

import jax
import jax.numpy as jnp
from jax import lax
from jax.experimental import pallas as pl
from jax.experimental.pallas import tpu as pltpu

EPS = 1e-5
VMEM_LIMIT_BYTES = 32 * 1024 * 1024  # explicit, safe on v5e/v6e/v7x; usage is ~few MiB


def round_up(x, m):
    return ((x + m - 1) // m) * m


class Dims(NamedTuple):
    in_dim: int
    h1: int
    h2: int
    out_dim: int
    in_pad: int
    h1_pad: int
    h2_pad: int
    out_pad: int


# --------------------------------------------------------------------------
# Kernels
# --------------------------------------------------------------------------
def _accumulate_stats(stats_ref, h):
    """Accumulate per-feature sum / sum-of-squares of h (f32) into stats_ref (2, F)."""
    i = pl.program_id(0)
    s = jnp.sum(h, axis=0, keepdims=True)
    ss = jnp.sum(h * h, axis=0, keepdims=True)
    tile_stats = jnp.concatenate([s, ss], axis=0)

    @pl.when(i == 0)
    def _():
        stats_ref[...] = jnp.zeros_like(stats_ref)

    stats_ref[...] += tile_stats


def _linear_stats_kernel(x_ref, w_ref, h_ref, stats_ref):
    """h = x @ W1ᵀ (bias dropped, cancelled by BN mean); accumulate BN1 stats."""
    h = jnp.dot(x_ref[...], w_ref[...], preferred_element_type=jnp.float32)
    h_ref[...] = h.astype(h_ref.dtype)
    _accumulate_stats(stats_ref, h)  # padded batch rows are exactly zero -> no masking needed


def _bn_relu_linear_stats_kernel(h_ref, aff_ref, w_ref, o_ref, stats_ref,
                                 *, n_rows, tile_rows, mask_tail):
    """a = relu(h*scale + shift); h2 = a @ W2ᵀ; accumulate BN2 stats."""
    i = pl.program_id(0)
    h = h_ref[...].astype(jnp.float32)
    a = jnp.maximum(h * aff_ref[0:1, :] + aff_ref[1:2, :], 0.0)
    if mask_tail:  # static: only emitted when the batch was padded to a tile multiple
        row = i * tile_rows + lax.broadcasted_iota(jnp.int32, a.shape, 0)
        a = jnp.where(row < n_rows, a, 0.0)
    h2 = jnp.dot(a.astype(w_ref.dtype), w_ref[...], preferred_element_type=jnp.float32)
    o_ref[...] = h2.astype(o_ref.dtype)
    _accumulate_stats(stats_ref, h2)


def _bn_relu_linear_out_kernel(h_ref, aff_ref, w_ref, b_ref, o_ref):
    """a = relu(h*scale + shift); out = a @ W3ᵀ + b3 (lane-dense padded output)."""
    h = h_ref[...].astype(jnp.float32)
    a = jnp.maximum(h * aff_ref[0:1, :] + aff_ref[1:2, :], 0.0)
    out = jnp.dot(a.astype(w_ref.dtype), w_ref[...],
                  preferred_element_type=jnp.float32) + b_ref[...]
    o_ref[...] = out.astype(o_ref.dtype)


# --------------------------------------------------------------------------
# Parameter packing (one time)
# --------------------------------------------------------------------------
def prepare_params(params, *, compute_dtype=jnp.float32):
    """Transpose weights, zero-pad every feature dim to 128 lanes, keep BN params f32.

    compute_dtype=jnp.bfloat16 enables MXU-native matmul inputs (v6e/v7x); BN math
    and accumulation stay f32 either way.
    """
    in_dim = params["w1"].shape[1]
    h1 = params["w1"].shape[0]
    h2 = params["w2"].shape[0]
    out_dim = params["w3"].shape[0]
    in_pad, h1_pad, h2_pad, out_pad = (round_up(d, 128) for d in (in_dim, h1, h2, out_dim))

    def pad_weight_t(w, rows, cols):  # (out, in) -> padded (in_pad, out_pad)
        wt = jnp.zeros((rows, cols), jnp.float32).at[: w.shape[1], : w.shape[0]].set(w.T)
        return wt.astype(compute_dtype)

    def pad_vec(v, cols):  # padded entries are exactly zero
        return jnp.zeros((1, cols), jnp.float32).at[0, : v.shape[0]].set(v)

    prep = {
        # layer1 / layer2 Linear biases intentionally dropped: a per-feature bias
        # right before training-mode BN is cancelled by the mean subtraction.
        "w1T": pad_weight_t(params["w1"], in_pad, h1_pad),
        "w2T": pad_weight_t(params["w2"], h1_pad, h2_pad),
        "w3T": pad_weight_t(params["w3"], h2_pad, out_pad),
        "b3":  pad_vec(params["b3"], out_pad),
        "g1":  pad_vec(params["g1"], h1_pad),    # gamma=0 on padded features keeps them 0
        "be1": pad_vec(params["be1"], h1_pad),
        "g2":  pad_vec(params["g2"], h2_pad),
        "be2": pad_vec(params["be2"], h2_pad),
    }
    dims = Dims(in_dim, h1, h2, out_dim, in_pad, h1_pad, h2_pad, out_pad)
    return prep, dims


def _bn_affine(stats, gamma, beta, n_rows):
    """Finalize streamed sums: scale = gamma*rsqrt(var+eps), shift = beta - mean*scale."""
    inv_n = 1.0 / float(n_rows)
    mean = stats[0:1, :] * inv_n
    var = jnp.maximum(stats[1:2, :] * inv_n - mean * mean, 0.0)  # biased variance
    scale = gamma * lax.rsqrt(var + EPS)
    shift = beta - mean * scale
    return jnp.concatenate([scale, shift], axis=0)  # (2, F) f32


# --------------------------------------------------------------------------
# Forward
# --------------------------------------------------------------------------
def batch_net_forward(x, prep, *, dims, tile_n=512):
    """x: (N, in_dim) f32.  prep/dims: output of prepare_params."""
    assert tile_n % 8 == 0
    n = x.shape[0]
    compute_dtype = prep["w1T"].dtype

    t = min(tile_n, round_up(n, 8))          # rows per grid step (sublane multiple)
    n_padded = round_up(n, t)
    num_tiles = n_padded // t

    # Pad batch to a tile multiple and features to 128 lanes (zeros).
    x_p = jnp.zeros((n_padded, dims.in_pad), compute_dtype)
    x_p = x_p.at[:n, : dims.in_dim].set(x.astype(compute_dtype))

    cp_acc = pltpu.CompilerParams(dimension_semantics=("arbitrary",),   # stats accumulator
                                  vmem_limit_bytes=VMEM_LIMIT_BYTES)
    cp_par = pltpu.CompilerParams(dimension_semantics=("parallel",),    # stats-free pass
                                  vmem_limit_bytes=VMEM_LIMIT_BYTES)

    # ---- pass 1: h1_lin = x @ W1ᵀ ; accumulate BN1 sum / sum-of-squares ----
    h1_lin, stats1 = pl.pallas_call(
        _linear_stats_kernel,
        grid=(num_tiles,),
        in_specs=[
            pl.BlockSpec((t, dims.in_pad), lambda i: (i, 0)),               # stream x
            pl.BlockSpec((dims.in_pad, dims.h1_pad), lambda i: (0, 0)),     # resident W1ᵀ
        ],
        out_specs=(
            pl.BlockSpec((t, dims.h1_pad), lambda i: (i, 0)),               # stream h1_lin
            pl.BlockSpec((2, dims.h1_pad), lambda i: (0, 0)),               # resident stats
        ),
        out_shape=(
            jax.ShapeDtypeStruct((n_padded, dims.h1_pad), compute_dtype),
            jax.ShapeDtypeStruct((2, dims.h1_pad), jnp.float32),
        ),
        compiler_params=cp_acc,
    )(x_p, prep["w1T"])

    aff1 = _bn_affine(stats1, prep["g1"], prep["be1"], n)

    # ---- pass 2: BN1 + ReLU ; h2_lin = a @ W2ᵀ ; accumulate BN2 stats ------
    k2 = functools.partial(_bn_relu_linear_stats_kernel,
                           n_rows=n, tile_rows=t, mask_tail=(n != n_padded))
    h2_lin, stats2 = pl.pallas_call(
        k2,
        grid=(num_tiles,),
        in_specs=[
            pl.BlockSpec((t, dims.h1_pad), lambda i: (i, 0)),               # stream h1_lin
            pl.BlockSpec((2, dims.h1_pad), lambda i: (0, 0)),               # resident scale/shift
            pl.BlockSpec((dims.h1_pad, dims.h2_pad), lambda i: (0, 0)),     # resident W2ᵀ
        ],
        out_specs=(
            pl.BlockSpec((t, dims.h2_pad), lambda i: (i, 0)),
            pl.BlockSpec((2, dims.h2_pad), lambda i: (0, 0)),
        ),
        out_shape=(
            jax.ShapeDtypeStruct((n_padded, dims.h2_pad), compute_dtype),
            jax.ShapeDtypeStruct((2, dims.h2_pad), jnp.float32),
        ),
        compiler_params=cp_acc,
    )(h1_lin, aff1, prep["w2T"])

    aff2 = _bn_affine(stats2, prep["g2"], prep["be2"], n)

    # ---- pass 3: BN2 + ReLU ; out = a @ W3ᵀ + b3 ---------------------------
    out_padded = pl.pallas_call(
        _bn_relu_linear_out_kernel,
        grid=(num_tiles,),
        in_specs=[
            pl.BlockSpec((t, dims.h2_pad), lambda i: (i, 0)),               # stream h2_lin
            pl.BlockSpec((2, dims.h2_pad), lambda i: (0, 0)),
            pl.BlockSpec((dims.h2_pad, dims.out_pad), lambda i: (0, 0)),
            pl.BlockSpec((1, dims.out_pad), lambda i: (0, 0)),
        ],
        out_specs=pl.BlockSpec((t, dims.out_pad), lambda i: (i, 0)),
        out_shape=jax.ShapeDtypeStruct((n_padded, dims.out_pad), jnp.float32),
        compiler_params=cp_par,
    )(h2_lin, aff2, prep["w3T"], prep["b3"])

    # Lane-dense stores inside the kernel; slice back to the logical shape here.
    # (Drop this slice if the consumer accepts the padded slab — cheapest on v5e.)
    return out_padded[:n, : dims.out_dim]


# --------------------------------------------------------------------------
# Reference / init
# --------------------------------------------------------------------------
def init_params(key, in_dim, h1, h2, out_dim):
    """Deterministic synthetic parameters matching nn.Linear / nn.BatchNorm1d shapes."""
    ks = jax.random.split(key, 6)

    def lin(kw, kb, fan_in, fan_out):
        bound = 1.0 / jnp.sqrt(fan_in)
        w = jax.random.uniform(kw, (fan_out, fan_in), jnp.float32, -bound, bound)
        b = jax.random.uniform(kb, (fan_out,), jnp.float32, -bound, bound)
        return w, b

    w1, b1 = lin(ks[0], ks[1], in_dim, h1)
    w2, b2 = lin(ks[2], ks[3], h1, h2)
    w3, b3 = lin(ks[4], ks[5], h2, out_dim)
    return {
        "w1": w1, "b1": b1, "g1": jnp.ones((h1,), jnp.float32), "be1": jnp.zeros((h1,), jnp.float32),
        "w2": w2, "b2": b2, "g2": jnp.ones((h2,), jnp.float32), "be2": jnp.zeros((h2,), jnp.float32),
        "w3": w3, "b3": b3,
    }


def reference_forward(x, p):
    """Pure-JAX reference mirroring PyTorch exactly (keeps the pre-BN biases)."""
    def bn_relu(h, g, b):
        m = h.mean(0, keepdims=True)
        v = ((h - m) ** 2).mean(0, keepdims=True)
        return jnp.maximum((h - m) / jnp.sqrt(v + EPS) * g + b, 0.0)

    h = bn_relu(x @ p["w1"].T + p["b1"], p["g1"], p["be1"])
    h = bn_relu(h @ p["w2"].T + p["b2"], p["g2"], p["be2"])
    return h @ p["w3"].T + p["b3"]


if __name__ == "__main__":
    # Small MNIST-like MLP; N deliberately not a tile multiple to exercise the
    # multi-tile streaming path and the ragged-tail masking.
    N, IN_DIM, H1, H2, OUT_DIM = 200, 64, 64, 32, 10
    TILE_N = 64  # small tile for the demo so the grid has several steps (prod default: 512)

    key = jax.random.PRNGKey(0)
    kx, kp = jax.random.split(key)
    x = jax.random.normal(kx, (N, IN_DIM), jnp.float32)
    params = init_params(kp, IN_DIM, H1, H2, OUT_DIM)
    ref = reference_forward(x, params)

    # --- f32 matmul path (strict tolerance) ---------------------------------
    prep32, dims32 = prepare_params(params, compute_dtype=jnp.float32)
    prep32 = jax.tree_util.tree_map(jax.block_until_ready, prep32)
    fwd32 = jax.jit(functools.partial(batch_net_forward, dims=dims32, tile_n=TILE_N))
    out32 = jax.block_until_ready(fwd32(x, prep32))
    assert out32.shape == (N, OUT_DIM), out32.shape
    assert jnp.allclose(out32, ref, atol=1e-4, rtol=1e-4), float(jnp.max(jnp.abs(out32 - ref)))

    # --- bf16 matmul-input path (v6e/v7x recommendation), looser tolerance ---
    prep16, dims16 = prepare_params(params, compute_dtype=jnp.bfloat16)
    prep16 = jax.tree_util.tree_map(jax.block_until_ready, prep16)
    fwd16 = jax.jit(functools.partial(batch_net_forward, dims=dims16, tile_n=TILE_N))
    out16 = jax.block_until_ready(fwd16(x, prep16))
    assert out16.shape == (N, OUT_DIM), out16.shape
    assert jnp.allclose(out16, ref, atol=1e-1, rtol=1e-1), float(jnp.max(jnp.abs(out16 - ref)))

    print("KERNEL_OK")
</pallas_src>

<mosaic_0001>
module attributes {stable_mosaic.version = 11 : i64} {
  func.func @_linear_stats_kernel(%arg0: i32, %arg1: memref<64x128xf32, #tpu.memory_space<vmem>>, %arg2: memref<128x128xf32, #tpu.memory_space<vmem>>, %arg3: memref<64x128xf32, #tpu.memory_space<vmem>>, %arg4: memref<2x128xf32, #tpu.memory_space<vmem>>) attributes {dimension_semantics = [#tpu.dimension_semantics<arbitrary>], iteration_bounds = array<i64: 4>, scalar_prefetch = 0 : i64, scratch_operands = 0 : i64, tpu.core_type = #tpu.core_type<tc>, window_params = [{transform_indices = @transform_0, window_bounds = array<i64: 64, 128>}, {pipeline_mode = #tpu.pipeline_mode<synchronous>, transform_indices = @transform_1, window_bounds = array<i64: 128, 128>}, {transform_indices = @transform_2, window_bounds = array<i64: 64, 128>}, {pipeline_mode = #tpu.pipeline_mode<synchronous>, transform_indices = @transform_3, window_bounds = array<i64: 2, 128>}]} {
    %c0 = arith.constant 0 : index
    %c0_0 = arith.constant 0 : index
    %0 = vector.load %arg1[%c0, %c0_0] : memref<64x128xf32, #tpu.memory_space<vmem>>, vector<64x128xf32>
    %c0_1 = arith.constant 0 : index
    %c0_2 = arith.constant 0 : index
    %1 = vector.load %arg2[%c0_1, %c0_2] : memref<128x128xf32, #tpu.memory_space<vmem>>, vector<128x128xf32>
    %cst = arith.constant dense<0.000000e+00> : vector<64x128xf32>
    %2 = tpu.matmul %0, %1, %cst {dimension_numbers = #tpu.dot_dimension_numbers<[1], [0], [0], [1], [0, 0, 1, 1], [], []>} : vector<64x128xf32>, vector<128x128xf32>, vector<64x128xf32> -> vector<64x128xf32>
    %c0_3 = arith.constant 0 : index
    %c0_4 = arith.constant 0 : index
    %3 = vector.load %arg3[%c0_3, %c0_4] : memref<64x128xf32, #tpu.memory_space<vmem>>, vector<64x128xf32>
    tpu.vector_store %arg3[%c0_3, %c0_4], %2 {strides = array<i32>} : memref<64x128xf32, #tpu.memory_space<vmem>>, vector<64x128xf32>,
    %cst_5 = arith.constant dense<0.000000e+00> : vector<128xf32>
    %4 = vector.multi_reduction <add>, %2, %cst_5 [0] : vector<64x128xf32> to vector<128xf32>
    %5 = vector.shape_cast %4 : vector<128xf32> to vector<1x128xf32>
    %6 = arith.mulf %2, %2 : vector<64x128xf32>
    %cst_6 = arith.constant dense<0.000000e+00> : vector<128xf32>
    %7 = vector.multi_reduction <add>, %6, %cst_6 [0] : vector<64x128xf32> to vector<128xf32>
    %8 = vector.shape_cast %7 : vector<128xf32> to vector<1x128xf32>
    %9 = tpu.concatenate %5, %8 in 0 : vector<1x128xf32>, vector<1x128xf32> -> vector<2x128xf32>
    %c0_i32 = arith.constant 0 : i32
    %10 = arith.cmpi eq, %arg0, %c0_i32 : i32
    %11 = arith.extui %10 : i1 to i32
    %c0_i32_7 = arith.constant 0 : i32
    %12 = arith.cmpi ne, %11, %c0_i32_7 : i32
    scf.if %12 {
      %cst_12 = arith.constant 0.000000e+00 : f32
      %16 = vector.broadcast %cst_12 : f32 to vector<2x128xf32>
      %c0_13 = arith.constant 0 : index
      %c0_14 = arith.constant 0 : index
      %17 = vector.load %arg4[%c0_13, %c0_14] : memref<2x128xf32, #tpu.memory_space<vmem>>, vector<2x128xf32>
      tpu.vector_store %arg4[%c0_13, %c0_14], %16 {strides = array<i32>} : memref<2x128xf32, #tpu.memory_space<vmem>>, vector<2x128xf32>,
    } else {
    }
    %c0_8 = arith.constant 0 : index
    %c0_9 = arith.constant 0 : index
    %13 = vector.load %arg4[%c0_8, %c0_9] : memref<2x128xf32, #tpu.memory_space<vmem>>, vector<2x128xf32>
    %14 = arith.addf %13, %9 : vector<2x128xf32>
    %c0_10 = arith.constant 0 : index
    %c0_11 = arith.constant 0 : index
    %15 = vector.load %arg4[%c0_10, %c0_11] : memref<2x128xf32, #tpu.memory_space<vmem>>, vector<2x128xf32>
    tpu.vector_store %arg4[%c0_10, %c0_11], %14 {strides = array<i32>} : memref<2x128xf32, #tpu.memory_space<vmem>>, vector<2x128xf32>,
    return
  }
  func.func @transform_0(%arg0: i32) -> (i32, i32) {
    %c0_i32 = arith.constant 0 : i32
    %c0_i32_0 = arith.constant 0 : i32
    return %arg0, %c0_i32 : i32, i32
  }
  func.func @transform_1(%arg0: i32) -> (i32, i32) {
    %c0_i32 = arith.constant 0 : i32
    %c0_i32_0 = arith.constant 0 : i32
    %c0_i32_1 = arith.constant 0 : i32
    return %c0_i32, %c0_i32_0 : i32, i32
  }
  func.func @transform_2(%arg0: i32) -> (i32, i32) {
    %c0_i32 = arith.constant 0 : i32
    %c0_i32_0 = arith.constant 0 : i32
    return %arg0, %c0_i32 : i32, i32
  }
  func.func @transform_3(%arg0: i32) -> (i32, i32) {
    %c0_i32 = arith.constant 0 : i32
    %c0_i32_0 = arith.constant 0 : i32
    %c0_i32_1 = arith.constant 0 : i32
    return %c0_i32, %c0_i32_0 : i32, i32
  }
}

module attributes {stable_mosaic.version = 11 : i64} {
  func.func @_bn_relu_linear_stats_kernel(%arg0: i32, %arg1: memref<64x128xf32, #tpu.memory_space<vmem>>, %arg2: memref<2x128xf32, #tpu.memory_space<vmem>>, %arg3: memref<128x128xf32, #tpu.memory_space<vmem>>, %arg4: memref<64x128xf32, #tpu.memory_space<vmem>>, %arg5: memref<2x128xf32, #tpu.memory_space<vmem>>) attributes {dimension_semantics = [#tpu.dimension_semantics<arbitrary>], iteration_bounds = array<i64: 4>, scalar_prefetch = 0 : i64, scratch_operands = 0 : i64, tpu.core_type = #tpu.core_type<tc>, window_params = [{transform_indices = @transform_0, window_bounds = array<i64: 64, 128>}, {pipeline_mode = #tpu.pipeline_mode<synchronous>, transform_indices = @transform_1, window_bounds = array<i64: 2, 128>}, {pipeline_mode = #tpu.pipeline_mode<synchronous>, transform_indices = @transform_2, window_bounds = array<i64: 128, 128>}, {transform_indices = @transform_3, window_bounds = array<i64: 64, 128>}, {pipeline_mode = #tpu.pipeline_mode<synchronous>, transform_indices = @transform_4, window_bounds = array<i64: 2, 128>}]} {
    %c0 = arith.constant 0 : index
    %c0_0 = arith.constant 0 : index
    %0 = vector.load %arg1[%c0, %c0_0] : memref<64x128xf32, #tpu.memory_space<vmem>>, vector<64x128xf32>
    %c0_1 = arith.constant 0 : index
    %c0_2 = arith.constant 0 : index
    %1 = vector.load %arg2[%c0_1, %c0_2] : memref<2x128xf32, #tpu.memory_space<vmem>>, vector<1x128xf32>
    %2 = vector.broadcast %1 : vector<1x128xf32> to vector<64x128xf32>
    %3 = arith.mulf %0, %2 : vector<64x128xf32>
    %c1 = arith.constant 1 : index
    %c0_3 = arith.constant 0 : index
    %4 = vector.load %arg2[%c1, %c0_3] : memref<2x128xf32, #tpu.memory_space<vmem>>, vector<1x128xf32>
    %5 = vector.broadcast %4 : vector<1x128xf32> to vector<64x128xf32>
    %6 = arith.addf %3, %5 : vector<64x128xf32>
    %cst = arith.constant 0.000000e+00 : f32
    %7 = vector.broadcast %cst : f32 to vector<64x128xf32>
    %8 = arith.maximumf %6, %7 : vector<64x128xf32>
    %c64_i32 = arith.constant 64 : i32
    %9 = arith.muli %arg0, %c64_i32 : i32
    %10 = tpu.iota {dimensions = array<i32: 0>} : vector<64x128xi32>
    %11 = vector.broadcast %9 : i32 to vector<64x128xi32>
    %12 = arith.addi %11, %10 : vector<64x128xi32>
    %c200_i32 = arith.constant 200 : i32
    %13 = vector.broadcast %c200_i32 : i32 to vector<64x128xi32>
    %14 = arith.cmpi slt, %12, %13 : vector<64x128xi32>
    %cst_4 = arith.constant 0.000000e+00 : f32
    %15 = vector.broadcast %cst_4 : f32 to vector<64x128xf32>
    %16 = arith.select %14, %8, %15 : vector<64x128xi1>, vector<64x128xf32>
    %c0_5 = arith.constant 0 : index
    %c0_6 = arith.constant 0 : index
    %17 = vector.load %arg3[%c0_5, %c0_6] : memref<128x128xf32, #tpu.memory_space<vmem>>, vector<128x128xf32>
    %cst_7 = arith.constant dense<0.000000e+00> : vector<64x128xf32>
    %18 = tpu.matmul %16, %17, %cst_7 {dimension_numbers = #tpu.dot_dimension_numbers<[1], [0], [0], [1], [0, 0, 1, 1], [], []>} : vector<64x128xf32>, vector<128x128xf32>, vector<64x128xf32> -> vector<64x128xf32>
    %c0_8 = arith.constant 0 : index
    %c0_9 = arith.constant 0 : index
    %19 = vector.load %arg4[%c0_8, %c0_9] : memref<64x128xf32, #tpu.memory_space<vmem>>, vector<64x128xf32>
    tpu.vector_store %arg4[%c0_8, %c0_9], %18 {strides = array<i32>} : memref<64x128xf32, #tpu.memory_space<vmem>>, vector<64x128xf32>,
    %cst_10 = arith.constant dense<0.000000e+00> : vector<128xf32>
    %20 = vector.multi_reduction <add>, %18, %cst_10 [0] : vector<64x128xf32> to vector<128xf32>
    %21 = vector.shape_cast %20 : vector<128xf32> to vector<1x128xf32>
    %22 = arith.mulf %18, %18 : vector<64x128xf32>
    %cst_11 = arith.constant dense<0.000000e+00> : vector<128xf32>
    %23 = vector.multi_reduction <add>, %22, %cst_11 [0] : vector<64x128xf32> to vector<128xf32>
    %24 = vector.shape_cast %23 : vector<128xf32> to vector<1x128xf32>
    %25 = tpu.concatenate %21, %24 in 0 : vector<1x128xf32>, vector<1x128xf32> -> vector<2x128xf32>
    %c0_i32 = arith.constant 0 : i32
    %26 = arith.cmpi eq, %arg0, %c0_i32 : i32
    %27 = arith.extui %26 : i1 to i32
    %c0_i32_12 = arith.constant 0 : i32
    %28 = arith.cmpi ne, %27, %c0_i32_12 : i32
    scf.if %28 {
      %cst_17 = arith.constant 0.000000e+00 : f32
      %32 = vector.broadcast %cst_17 : f32 to vector<2x128xf32>
      %c0_18 = arith.constant 0 : index
      %c0_19 = arith.constant 0 : index
      %33 = vector.load %arg5[%c0_18, %c0_19] : memref<2x128xf32, #tpu.memory_space<vmem>>, vector<2x128xf32>
      tpu.vector_store %arg5[%c0_18, %c0_19], %32 {strides = array<i32>} : memref<2x128xf32, #tpu.memory_space<vmem>>, vector<2x128xf32>,
    } else {
    }
    %c0_13 = arith.constant 0 : index
    %c0_14 = arith.constant 0 : index
    %29 = vector.load %arg5[%c0_13, %c0_14] : memref<2x128xf32, #tpu.memory_space<vmem>>, vector<2x128xf32>
    %30 = arith.addf %29, %25 : vector<2x128xf32>
    %c0_15 = arith.constant 0 : index
    %c0_16 = arith.constant 0 : index
    %31 = vector.load %arg5[%c0_15, %c0_16] : memref<2x128xf32, #tpu.memory_space<vmem>>, vector<2x128xf32>
    tpu.vector_store %arg5[%c0_15, %c0_16], %30 {strides = array<i32>} : memref<2x128xf32, #tpu.memory_space<vmem>>, vector<2x128xf32>,
    return
  }
  func.func @transform_0(%arg0: i32) -> (i32, i32) {
    %c0_i32 = arith.constant 0 : i32
    %c0_i32_0 = arith.constant 0 : i32
    return %arg0, %c0_i32 : i32, i32
  }
  func.func @transform_1(%arg0: i32) -> (i32, i32) {
    %c0_i32 = arith.constant 0 : i32
    %c0_i32_0 = arith.constant 0 : i32
    %c0_i32_1 = arith.constant 0 : i32
    return %c0_i32, %c0_i32_0 : i32, i32
  }
  func.func @transform_2(%arg0: i32) -> (i32, i32) {
    %c0_i32 = arith.constant 0 : i32
    %c0_i32_0 = arith.constant 0 : i32
    %c0_i32_1 = arith.constant 0 : i32
    return %c0_i32, %c0_i32_0 : i32, i32
  }
  func.func @transform_3(%arg0: i32) -> (i32, i32) {
    %c0_i32 = arith.constant 0 : i32
    %c0_i32_0 = arith.constant 0 : i32
    return %arg0, %c0_i32 : i32, i32
  }
  func.func @transform_4(%arg0: i32) -> (i32, i32) {
    %c0_i32 = arith.constant 0 : i32
    %c0_i32_0 = arith.constant 0 : i32
    %c0_i32_1 = arith.constant 0 : i32
    return %c0_i32, %c0_i32_0 : i32, i32
  }
}

module attributes {stable_mosaic.version = 11 : i64} {
  func.func @_bn_relu_linear_out_kernel(%arg0: i32, %arg1: memref<64x128xf32, #tpu.memory_space<vmem>>, %arg2: memref<2x128xf32, #tpu.memory_space<vmem>>, %arg3: memref<128x128xf32, #tpu.memory_space<vmem>>, %arg4: memref<1x128xf32, #tpu.memory_space<vmem>>, %arg5: memref<64x128xf32, #tpu.memory_space<vmem>>) attributes {dimension_semantics = [#tpu.dimension_semantics<parallel>], iteration_bounds = array<i64: 4>, scalar_prefetch = 0 : i64, scratch_operands = 0 : i64, tpu.core_type = #tpu.core_type<tc>, window_params = [{transform_indices = @transform_0, window_bounds = array<i64: 64, 128>}, {pipeline_mode = #tpu.pipeline_mode<synchronous>, transform_indices = @transform_1, window_bounds = array<i64: 2, 128>}, {pipeline_mode = #tpu.pipeline_mode<synchronous>, transform_indices = @transform_2, window_bounds = array<i64: 128, 128>}, {pipeline_mode = #tpu.pipeline_mode<synchronous>, transform_indices = @transform_3, window_bounds = array<i64: 1, 128>}, {transform_indices = @transform_4, window_bounds = array<i64: 64, 128>}]} {
    %c0 = arith.constant 0 : index
    %c0_0 = arith.constant 0 : index
    %0 = vector.load %arg1[%c0, %c0_0] : memref<64x128xf32, #tpu.memory_space<vmem>>, vector<64x128xf32>
    %c0_1 = arith.constant 0 : index
    %c0_2 = arith.constant 0 : index
    %1 = vector.load %arg2[%c0_1, %c0_2] : memref<2x128xf32, #tpu.memory_space<vmem>>, vector<1x128xf32>
    %2 = vector.broadcast %1 : vector<1x128xf32> to vector<64x128xf32>
    %3 = arith.mulf %0, %2 : vector<64x128xf32>
    %c1 = arith.constant 1 : index
    %c0_3 = arith.constant 0 : index
    %4 = vector.load %arg2[%c1, %c0_3] : memref<2x128xf32, #tpu.memory_space<vmem>>, vector<1x128xf32>
    %5 = vector.broadcast %4 : vector<1x128xf32> to vector<64x128xf32>
    %6 = arith.addf %3, %5 : vector<64x128xf32>
    %cst = arith.constant 0.000000e+00 : f32
    %7 = vector.broadcast %cst : f32 to vector<64x128xf32>
    %8 = arith.maximumf %6, %7 : vector<64x128xf32>
    %c0_4 = arith.constant 0 : index
    %c0_5 = arith.constant 0 : index
    %9 = vector.load %arg3[%c0_4, %c0_5] : memref<128x128xf32, #tpu.memory_space<vmem>>, vector<128x128xf32>
    %cst_6 = arith.constant dense<0.000000e+00> : vector<64x128xf32>
    %10 = tpu.matmul %8, %9, %cst_6 {dimension_numbers = #tpu.dot_dimension_numbers<[1], [0], [0], [1], [0, 0, 1, 1], [], []>} : vector<64x128xf32>, vector<128x128xf32>, vector<64x128xf32> -> vector<64x128xf32>
    %c0_7 = arith.constant 0 : index
    %c0_8 = arith.constant 0 : index
    %11 = vector.load %arg4[%c0_7, %c0_8] : memref<1x128xf32, #tpu.memory_space<vmem>>, vector<1x128xf32>
    %12 = vector.broadcast %11 : vector<1x128xf32> to vector<64x128xf32>
    %13 = arith.addf %10, %12 : vector<64x128xf32>
    %c0_9 = arith.constant 0 : index
    %c0_10 = arith.constant 0 : index
    %14 = vector.load %arg5[%c0_9, %c0_10] : memref<64x128xf32, #tpu.memory_space<vmem>>, vector<64x128xf32>
    tpu.vector_store %arg5[%c0_9, %c0_10], %13 {strides = array<i32>} : memref<64x128xf32, #tpu.memory_space<vmem>>, vector<64x128xf32>,
    return
  }
  func.func @transform_0(%arg0: i32) -> (i32, i32) {
    %c0_i32 = arith.constant 0 : i32
    %c0_i32_0 = arith.constant 0 : i32
    return %arg0, %c0_i32 : i32, i32
  }
  func.func @transform_1(%arg0: i32) -> (i32, i32) {
    %c0_i32 = arith.constant 0 : i32
    %c0_i32_0 = arith.constant 0 : i32
    %c0_i32_1 = arith.constant 0 : i32
    return %c0_i32, %c0_i32_0 : i32, i32
  }
  func.func @transform_2(%arg0: i32) -> (i32, i32) {
    %c0_i32 = arith.constant 0 : i32
    %c0_i32_0 = arith.constant 0 : i32
    %c0_i32_1 = arith.constant 0 : i32
    return %c0_i32, %c0_i32_0 : i32, i32
  }
  func.func @transform_3(%arg0: i32) -> (i32, i32) {
    %c0_i32 = arith.constant 0 : i32
    %c0_i32_0 = arith.constant 0 : i32
    %c0_i32_1 = arith.constant 0 : i32
    return %c0_i32, %c0_i32_0 : i32, i32
  }
  func.func @transform_4(%arg0: i32) -> (i32, i32) {
    %c0_i32 = arith.constant 0 : i32
    %c0_i32_0 = arith.constant 0 : i32
    return %arg0, %c0_i32 : i32, i32
  }
}

</mosaic_0001>

<llo_original>
// kernel: batch_net_forward.3
$region0: #{batch_net_forward.3}
  #allocation0 [shape = 'u32[]', space=smem, size = 0x4, offset = 0x4, fixed_abs, tag = 'smem constant byte address 0x4 - core index']
  #allocation1 [shape = 'u32[144,128]{1,0:T(1,128)}', space=vmem, size = 0x12000, scoped, tag = 'internal scratch']
  %s0 = inlined_call_operand.vmem [shape: f32[256,128], index: 0, kind: input, shape index: {}]
  %s1 = inlined_call_operand.vmem [shape: f32[128,128], index: 1, kind: input, shape index: {}]
  %s2 = inlined_call_operand.vmem [shape: f32[256,128], index: 2, kind: output, shape index: {0}]
  %s3 = inlined_call_operand.vmem [shape: f32[2,128], index: 3, kind: output, shape index: {1}]
  %4 = xla_tuple %s2, %s3
  %s5 = sld [smem:[#allocation0]]
  $region53: #{batch_net_forward.3} parent=0
    _
  %s7 = ssub.s32 1, %s5
  %s8 = scalar_select 0, %s7, %s5
  loop: start=0, step=1, limit=6
  $region2: #{batch_net_forward.3} parent=0 // loop_pre_header
    _
  $region3: #{batch_net_forward.3} parent=0 // loop_header
    %s10 = sphi 0, %s14
    %p11 = scmp.ge.s32.totalorder %s10, 6
    %s20 = sphi 0, %s22
    %s23 = sphi 0, %s20
    %s24 = sphi 0, %s23
    %s40 = sphi 0, %s24
    %s44 = sphi 0, %s44
    %s46 = sphi 0, %s44
    %s47 = sphi 0, %s46
    %s61 = sphi 0, %s47
    %s67 = sphi 0, %s69
    %s70 = sphi 0, %s67
    %s71 = sphi 0, %s70
    %s87 = sphi 0, %s71
    %s91 = sphi 0, %s91
    %s93 = sphi 0, %s91
    %s94 = sphi 0, %s93
    %s108 = sphi 0, %s94
  $region4: #{batch_net_forward.3} parent=0 // loop_header_branch
    %13 = sbr.rel (%p11) target = $region8
  $region5: #{batch_net_forward.3} parent=0 // loop_body
    %s15 = ssub.s32 %s10, 1
    %s16 = ssub.s32 %s10, 2
    %s17 = sadd.s32 %s10, 1
    %s18 = ssub.s32 %s10, %s17
    %p19 = scmp.eq.s32.totalorder %s18, 0
    %s21 = sadd.s32 %s20, 1
    %s22 = scalar_select %p19, %s20, %s21
    %p25 = pneg %p19
    %p26 = scmp.eq.s32.totalorder %s10, 3
    %p27 = por %p25, %p26
    %p28 = scmp.ne.s32.totalorder %s20, %s23
    %p29 = scmp.eq.s32.totalorder %s10, 0
    %p30 = por %p28, %p29
    %p31 = scmp.ne.s32.totalorder %s20, %s23
    %p32 = scmp.eq.s32.totalorder %s15, 3
    %p33 = por %p31, %p32
    %p34 = scmp.ne.s32.totalorder %s23, %s24
    %p35 = scmp.eq.s32.totalorder %s15, 0
    %p36 = por %p34, %p35
    %p37 = scmp.ne.s32.totalorder %s23, %s24
    %p38 = scmp.eq.s32.totalorder %s16, 3
    %p39 = por %p37, %p38
    %p41 = scmp.ne.s32.totalorder %s24, %s40
    %p42 = scmp.eq.s32.totalorder %s16, 0
    %p43 = por %p41, %p42
    %s45 = sadd.s32 %s44, 1
    %p48 = scmp.eq.s32.totalorder %s10, 3
    %p49 = scmp.ne.s32.totalorder %s44, %s46
    %p50 = scmp.eq.s32.totalorder %s10, 0
    %p51 = por %p49, %p50
    %p52 = scmp.ne.s32.totalorder %s44, %s46
    %p53 = scmp.eq.s32.totalorder %s15, 3
    %p54 = por %p52, %p53
    %p55 = scmp.ne.s32.totalorder %s46, %s47
    %p56 = scmp.eq.s32.totalorder %s15, 0
    %p57 = por %p55, %p56
    %p58 = scmp.ne.s32.totalorder %s46, %s47
    %p59 = scmp.eq.s32.totalorder %s16, 3
    %p60 = por %p58, %p59
    %p62 = scmp.ne.s32.totalorder %s47, %s61
    %p63 = scmp.eq.s32.totalorder %s16, 0
    %p64 = por %p62, %p63
    %s65 = ssub.s32 %s10, %s17
    %p66 = scmp.eq.s32.totalorder %s65, 0
    %s68 = sadd.s32 %s67, 1
    %s69 = scalar_select %p66, %s67, %s68
    %p72 = pneg %p66
    %p73 = scmp.eq.s32.totalorder %s10, 3
    %p74 = por %p72, %p73
    %p75 = scmp.ne.s32.totalorder %s67, %s70
    %p76 = scmp.eq.s32.totalorder %s10, 0
    %p77 = por %p75, %p76
    %p78 = scmp.ne.s32.totalorder %s67, %s70
    %p79 = scmp.eq.s32.totalorder %s15, 3
    %p80 = por %p78, %p79
    %p81 = scmp.ne.s32.totalorder %s70, %s71
    %p82 = scmp.eq.s32.totalorder %s15, 0
    %p83 = por %p81, %p82
    %p84 = scmp.ne.s32.totalorder %s70, %s71
    %p85 = scmp.eq.s32.totalorder %s16, 3
    %p86 = por %p84, %p85
    %p88 = scmp.ne.s32.totalorder %s71, %s87
    %p89 = scmp.eq.s32.totalorder %s16, 0
    %p90 = por %p88, %p89
    %s92 = sadd.s32 %s91, 1
    %p95 = scmp.eq.s32.totalorder %s10, 3
    %p96 = scmp.ne.s32.totalorder %s91, %s93
    %p97 = scmp.eq.s32.totalorder %s10, 0
    %p98 = por %p96, %p97
    %p99 = scmp.ne.s32.totalorder %s91, %s93
    %p100 = scmp.eq.s32.totalorder %s15, 3
    %p101 = por %p99, %p100
    %p102 = scmp.ne.s32.totalorder %s93, %s94
    %p103 = scmp.eq.s32.totalorder %s15, 0
    %p104 = por %p102, %p103
    %p105 = scmp.ne.s32.totalorder %s93, %s94
    %p106 = scmp.eq.s32.totalorder %s16, 3
    %p107 = por %p105, %p106
    %p109 = scmp.ne.s32.totalorder %s94, %s108
    %p110 = scmp.eq.s32.totalorder %s16, 0
    %p111 = por %p109, %p110
    %p112 = scmp.le.s32.totalorder 1, %s10
    %p113 = scmp.lt.s32.totalorder %s10, 5
    %p114 = pnand %p112, %p113
    %p115 = pneg %p114
    // Predicated region
    $region9: #{batch_net_forward.3} parent=5 // pred_check
      _
    $region10: #{batch_net_forward.3} parent=5 // pred_check_branch
      %117 = sbr.rel (%p114) target = $region12
    $region11: #{batch_net_forward.3} parent=5 // pred_region
      %s118 = ssub.s32 %s10, 1
      // Predicated region
      $region13: #{batch_net_forward.3} parent=11 // pred_check
        %p119 = pneg %p57
      $region14: #{batch_net_forward.3} parent=11 // pred_check_branch
        %121 = sbr.rel (%p119) target = $region16
      $region15: #{batch_net_forward.3} parent=11 // pred_region
        _
      $region16: #{batch_net_forward.3} parent=11 // pred_fallthru
        _
    $region12: #{batch_net_forward.3} parent=5 // pred_fallthru
      _
    %p122 = scmp.lt.s32.totalorder %s10, 4
    // Predicated region
    $region17: #{batch_net_forward.3} parent=5 // pred_check
      %p123 = pneg %p122
    $region18: #{batch_net_forward.3} parent=5 // pred_check_branch
      %125 = sbr.rel (%p123) target = $region20
    $region19: #{batch_net_forward.3} parent=5 // pred_region
      // Predicated region
      $region21: #{batch_net_forward.3} parent=19 // pred_check
        %p126 = pneg %p30
      $region22: #{batch_net_forward.3} parent=19 // pred_check_branch
        %128 = sbr.rel (%p126) target = $region24
      $region23: #{batch_net_forward.3} parent=19 // pred_region
        %s129 = smul.u32 8, %s10
        %p130 = scmp.lt.s32.totalorder %s129, 31
        %s131 = scalar_select %p130, %s129, 31
        %s132 = smul.addr %s131, 8
        %s133 = scalar_lea.vmem %s0, %s132
        %s134 = smul.u32 8, %s10
      $region24: #{batch_net_forward.3} parent=19 // pred_fallthru
        _
    $region20: #{batch_net_forward.3} parent=5 // pred_fallthru
      _
    %p135 = scmp.le.s32.totalorder 1, %s10
    %p136 = scmp.lt.s32.totalorder %s10, 5
    %p137 = pnand %p135, %p136
    %p138 = pneg %p137
    // Predicated region
    $region25: #{batch_net_forward.3} parent=5 // pred_check
      _
    $region26: #{batch_net_forward.3} parent=5 // pred_check_branch
      %140 = sbr.rel (%p137) target = $region28
    $region27: #{batch_net_forward.3} parent=5 // pred_region
      %s141 = ssub.s32 %s10, 1
      %s142 = smul.u32 8, %s15
      %p143 = scmp.lt.s32.totalorder %s142, 31
      %s144 = scalar_select %p143, %s142, 31
      %s145 = smul.addr %s144, 8
      %s146 = scalar_lea.vmem %s0, %s145
      %p147 = pneg %p36
      %p148 = pneg %p33
      %p149 = pneg %p57
      %p150 = pneg %p54
      %p151 = pneg %p83
      %p152 = pneg %p80
      %s153 = smul.u32 8, %s15
      %p154 = scmp.lt.s32.totalorder %s153, 31
      %s155 = scalar_select %p154, %s153, 31
      %s156 = smul.addr %s155, 8
      %s157 = scalar_lea.vmem %s2, %s156
      %p158 = pneg %p104
      %p159 = pneg %p101
      %s160 = smul.u32 8, %s15
      %p161 = scmp.lt.s32.totalorder %s160, 31
      %s162 = scalar_select %p161, %s160, 31
      %s163 = smul.addr %s162, 8
      %s164 = scalar_lea.vmem %s0, %s163
      %s165 = smul.u32 8, %s15
      %s166 = smul.u32 8, %s15
      %p167 = scmp.lt.s32.totalorder %s166, 31
      %s168 = scalar_select %p167, %s166, 31
      %s169 = smul.addr %s168, 8
      %s170 = scalar_lea.vmem %s2, %s169
      %s171 = smul.u32 8, %s15
      %v172 = vld [vmem:[%s164] sm:$0xff]
      %v173 = vld [vmem:[%s164 + $0x8] sm:$0xff]
      %v174 = vld [vmem:[%s164 + $0x10] sm:$0xff]
      %v175 = vld [vmem:[%s164 + $0x18] sm:$0xff]
      %v176 = vld [vmem:[%s164 + $0x20] sm:$0xff]
      %v177 = vld [vmem:[%s164 + $0x28] sm:$0xff]
      %v178 = vld [vmem:[%s164 + $0x30] sm:$0xff]
      %v179 = vld [vmem:[%s164 + $0x38] sm:$0xff]
      %v180 = vld [vmem:[%s1] sm:$0xff]
      %v181 = vld [vmem:[%s1 + $0x8] sm:$0xff]
      %v182 = vld [vmem:[%s1 + $0x10] sm:$0xff]
      %v183 = vld [vmem:[%s1 + $0x18] sm:$0xff]
      %v184 = vld [vmem:[%s1 + $0x20] sm:$0xff]
      %v185 = vld [vmem:[%s1 + $0x28] sm:$0xff]
      %v186 = vld [vmem:[%s1 + $0x30] sm:$0xff]
      %v187 = vld [vmem:[%s1 + $0x38] sm:$0xff]
      %v188 = vld [vmem:[%s1 + $0x40] sm:$0xff]
      %v189 = vld [vmem:[%s1 + $0x48] sm:$0xff]
      %v190 = vld [vmem:[%s1 + $0x50] sm:$0xff]
      %v191 = vld [vmem:[%s1 + $0x58] sm:$0xff]
      %v192 = vld [vmem:[%s1 + $0x60] sm:$0xff]
      %v193 = vld [vmem:[%s1 + $0x68] sm:$0xff]
      %v194 = vld [vmem:[%s1 + $0x70] sm:$0xff]
      %v195 = vld [vmem:[%s1 + $0x78] sm:$0xff]
      %196 = vmatprep.subr.mxu0 0.0
      %197 = vmatpush1.msra.mxu0 %v180
      %198 = vmatprep.subr.mxu0 0.0
      %199 = vmatpush1.msra.mxu0 %v181
      %200 = vmatprep.subr.mxu0 0.0
      %201 = vmatpush1.msra.mxu0 %v182
      %202 = vmatprep.subr.mxu0 0.0
      %203 = vmatpush1.msra.mxu0 %v183
      %204 = vmatprep.subr.mxu0 0.0
      %205 = vmatpush1.msra.mxu0 %v184
      %206 = vmatprep.subr.mxu0 0.0
      %207 = vmatpush1.msra.mxu0 %v185
      %208 = vmatprep.subr.mxu0 0.0
      %209 = vmatpush1.msra.mxu0 %v186
      %210 = vmatprep.subr.mxu0 0.0
      %211 = vmatpush1.msra.mxu0 %v187
      %212 = vmatprep.subr.mxu0 0.0
      %213 = vmatpush1.msra.mxu0 %v188
      %214 = vmatprep.subr.mxu0 0.0
      %215 = vmatpush1.msra.mxu0 %v189
      %216 = vmatprep.subr.mxu0 0.0
      %217 = vmatpush1.msra.mxu0 %v190
      %218 = vmatprep.subr.mxu0 0.0
      %219 = vmatpush1.msra.mxu0 %v191
      %220 = vmatprep.subr.mxu0 0.0
      %221 = vmatpush1.msra.mxu0 %v192
      %222 = vmatprep.subr.mxu0 0.0
      %223 = vmatpush1.msra.mxu0 %v193
      %224 = vmatprep.subr.mxu0 0.0
      %225 = vmatpush1.msra.mxu0 %v194
      %226 = vmatprep.subr.mxu0 0.0
      %227 = vmatpush1.msra.mxu0 %v195
      %228 = vmatprep.subr.mxu0 0.0
      %229 = vmatpush1.msra.mxu0 0.0
      %230 = vmatprep.subr.mxu0 0.0
      %231 = vmatpush1.msra.mxu0 0.0
      %232 = vmatprep.subr.mxu0 0.0
      %233 = vmatpush1.msra.mxu0 0.0
      %234 = vmatprep.subr.mxu0 0.0
      %235 = vmatpush1.msra.mxu0 0.0
      %236 = vmatprep.subr.mxu0 0.0
      %237 = vmatpush1.msra.mxu0 0.0
      %238 = vmatprep.subr.mxu0 0.0
      %239 = vmatpush1.msra.mxu0 0.0
      %240 = vmatprep.subr.mxu0 0.0
      %241 = vmatpush1.msra.mxu0 0.0
      %242 = vmatprep.subr.mxu0 0.0
      %243 = vmatpush1.msra.mxu0 0.0
      %244 = vmatprep.subr.mxu0 0.0
      %245 = vmatpush1.msra.mxu0 0.0
      %246 = vmatprep.subr.mxu0 0.0
      %247 = vmatpush1.msra.mxu0 0.0
      %248 = vmatprep.subr.mxu0 0.0
      %249 = vmatpush1.msra.mxu0 0.0
      %250 = vmatprep.subr.mxu0 0.0
      %251 = vmatpush1.msra.mxu0 0.0
      %252 = vmatprep.subr.mxu0 0.0
      %253 = vmatpush1.msra.mxu0 0.0
      %254 = vmatprep.subr.mxu0 0.0
      %255 = vmatpush1.msra.mxu0 0.0
      %256 = vmatprep.subr.mxu0 0.0
      %257 = vmatpush1.msra.mxu0 0.0
      %258 = vmatprep.subr.mxu0 0.0
      %259 = vmatpush1.msra.mxu0 0.0
      %260 = vmatprep.mubr.f32.mxu0 0.0
      %261 = vmatmul.mubr.f32.gmra.mrb[0].mxu0 %v172
      %v262 = vpop.f32.mrb[0].mxu0
      %v263 = vadd.f32 0.0, %v262
      %v264 = vpop.f32.mrb[0].mxu0
      %265 = vmatprep.mubr.f32.mxu0 0.0
      %266 = vmatmul.mubr.f32.gmra.mrb[0].mxu0 %v173
      %v267 = vpop.f32.mrb[0].mxu0
      %v268 = vadd.f32 0.0, %v267
      %v269 = vpop.f32.mrb[0].mxu0
      %270 = vmatprep.mubr.f32.mxu0 0.0
      %271 = vmatmul.mubr.f32.gmra.mrb[0].mxu0 %v174
      %v272 = vpop.f32.mrb[0].mxu0
      %v273 = vadd.f32 0.0, %v272
      %v274 = vpop.f32.mrb[0].mxu0
      %275 = vmatprep.mubr.f32.mxu0 0.0
      %276 = vmatmul.mubr.f32.gmra.mrb[0].mxu0 %v175
      %v277 = vpop.f32.mrb[0].mxu0
      %v278 = vadd.f32 0.0, %v277
      %v279 = vpop.f32.mrb[0].mxu0
      %280 = vmatprep.mubr.f32.mxu0 0.0
      %281 = vmatmul.mubr.f32.gmra.mrb[0].mxu0 %v176
      %v282 = vpop.f32.mrb[0].mxu0
      %v283 = vadd.f32 0.0, %v282
      %v284 = vpop.f32.mrb[0].mxu0
      %285 = vmatprep.mubr.f32.mxu0 0.0
      %286 = vmatmul.mubr.f32.gmra.mrb[0].mxu0 %v177
      %v287 = vpop.f32.mrb[0].mxu0
      %v288 = vadd.f32 0.0, %v287
      %v289 = vpop.f32.mrb[0].mxu0
      %290 = vmatprep.mubr.f32.mxu0 0.0
      %291 = vmatmul.mubr.f32.gmra.mrb[0].mxu0 %v178
      %v292 = vpop.f32.mrb[0].mxu0
      %v293 = vadd.f32 0.0, %v292
      %v294 = vpop.f32.mrb[0].mxu0
      %295 = vmatprep.mubr.f32.mxu0 0.0
      %296 = vmatmul.mubr.f32.gmra.mrb[0].mxu0 %v179
      %v297 = vpop.f32.mrb[0].mxu0
      %v298 = vadd.f32 0.0, %v297
      %v299 = vpop.f32.mrb[0].mxu0
      %300 = vdwg.mxu0
      %301 = vst [vmem:[%s170] sm:$0xff] %v263
      %302 = vst [vmem:[%s170 + $0x8] sm:$0xff] %v268
      %303 = vst [vmem:[%s170 + $0x10] sm:$0xff] %v273
      %304 = vst [vmem:[%s170 + $0x18] sm:$0xff] %v278
      %305 = vst [vmem:[%s170 + $0x20] sm:$0xff] %v283
      %306 = vst [vmem:[%s170 + $0x28] sm:$0xff] %v288
      %307 = vst [vmem:[%s170 + $0x30] sm:$0xff] %v293
      %308 = vst [vmem:[%s170 + $0x38] sm:$0xff] %v298
      %v309 = vadd.f32 %v263, %v268
      %v310 = vadd.f32 %v309, %v273
      %v311 = vadd.f32 %v310, %v278
      %v312 = vadd.f32 %v311, %v283
      %v313 = vadd.f32 %v312, %v288
      %v314 = vadd.f32 %v313, %v293
      %v315 = vadd.f32 %v314, %v298
      %v316 = vrot.slane %v315, 4
      %v317 = vadd.f32 %v315, %v316
      %v318 = vrot.slane %v317, 2
      %v319 = vadd.f32 %v317, %v318
      %v320 = vrot.slane %v319, 1
      %v321 = vadd.f32 %v319, %v320
      %v322 = vmul.f32 %v263, %v263
      %v323 = vmul.f32 %v268, %v268
      %v324 = vmul.f32 %v273, %v273
      %v325 = vmul.f32 %v278, %v278
      %v326 = vmul.f32 %v283, %v283
      %v327 = vmul.f32 %v288, %v288
      %v328 = vmul.f32 %v293, %v293
      %v329 = vmul.f32 %v298, %v298
      %v330 = vadd.f32 %v322, %v323
      %v331 = vadd.f32 %v330, %v324
      %v332 = vadd.f32 %v331, %v325
      %v333 = vadd.f32 %v332, %v326
      %v334 = vadd.f32 %v333, %v327
      %v335 = vadd.f32 %v334, %v328
      %v336 = vadd.f32 %v335, %v329
      %v337 = vrot.slane %v336, 4
      %v338 = vadd.f32 %v336, %v337
      %v339 = vrot.slane %v338, 2
      %v340 = vadd.f32 %v338, %v339
      %v341 = vrot.slane %v340, 1
      %v342 = vadd.f32 %v340, %v341
      %vm343 = vcmask 1040384
      %v344 = vsel %vm343, %v321, %v342
      %p345 = scmp.eq.s32.totalorder %s15, 0
      // Predicated region
      $region29: #{batch_net_forward.3} parent=27 // pred_check
        %p346 = pneg %p345
      $region30: #{batch_net_forward.3} parent=27 // pred_check_branch
        %348 = sbr.rel (%p346) target = $region32
      $region31: #{batch_net_forward.3} parent=27 // pred_region
        %349 = vst [vmem:[%s3] sm:$0x3] 0.0
      $region32: #{batch_net_forward.3} parent=27 // pred_fallthru
        _
      %v350 = vld [vmem:[%s3] sm:$0x3]
      %v351 = vadd.f32 %v350, %v344
      %352 = vst [vmem:[%s3] sm:$0x3] %v351
      %s353 = smul.u32 8, %s15
      %p354 = scmp.lt.s32.totalorder %s353, 31
      %s355 = scalar_select %p354, %s353, 31
      %s356 = smul.addr %s355, 8
      %s357 = scalar_lea.vmem %s2, %s356
      // Predicated region
      $region33: #{batch_net_forward.3} parent=27 // pred_check
        %p358 = pneg %p80
      $region34: #{batch_net_forward.3} parent=27 // pred_check_branch
        %360 = sbr.rel (%p358) target = $region36
      $region35: #{batch_net_forward.3} parent=27 // pred_region
        %s361 = smul.u32 8, %s15
      $region36: #{batch_net_forward.3} parent=27 // pred_fallthru
        _
      // Predicated region
      $region37: #{batch_net_forward.3} parent=27 // pred_check
        %p362 = pneg %p101
      $region38: #{batch_net_forward.3} parent=27 // pred_check_branch
        %364 = sbr.rel (%p362) target = $region40
      $region39: #{batch_net_forward.3} parent=27 // pred_region
        _
      $region40: #{batch_net_forward.3} parent=27 // pred_fallthru
        _
      // Predicated region
      $region41: #{batch_net_forward.3} parent=27 // pred_check
        %p365 = pneg %p101
      $region42: #{batch_net_forward.3} parent=27 // pred_check_branch
        %367 = sbr.rel (%p365) target = $region44
      $region43: #{batch_net_forward.3} parent=27 // pred_region
        _
      $region44: #{batch_net_forward.3} parent=27 // pred_fallthru
        _
    $region28: #{batch_net_forward.3} parent=5 // pred_fallthru
      _
    %p368 = scmp.le.s32.totalorder 2, %s10
    // Predicated region
    $region45: #{batch_net_forward.3} parent=5 // pred_check
      %p369 = pneg %p368
    $region46: #{batch_net_forward.3} parent=5 // pred_check_branch
      %371 = sbr.rel (%p369) target = $region48
    $region47: #{batch_net_forward.3} parent=5 // pred_region
      %s372 = ssub.s32 %s10, 2
      // Predicated region
      $region49: #{batch_net_forward.3} parent=47 // pred_check
        %p373 = pneg %p86
      $region50: #{batch_net_forward.3} parent=47 // pred_check_branch
        %375 = sbr.rel (%p373) target = $region52
      $region51: #{batch_net_forward.3} parent=47 // pred_region
        %s376 = smul.u32 8, %s16
        %p377 = scmp.lt.s32.totalorder %s376, 31
        %s378 = scalar_select %p377, %s376, 31
        %s379 = smul.addr %s378, 8
        %s380 = scalar_lea.vmem %s2, %s379
      $region52: #{batch_net_forward.3} parent=47 // pred_fallthru
        _
    $region48: #{batch_net_forward.3} parent=5 // pred_fallthru
      _
  $region6: #{batch_net_forward.3} parent=0 // loop_footer
    %s14 = sadd.s32 1, %s10
  $region7: #{batch_net_forward.3} parent=0 // loop_footer_branch
    %9 = sbr.rel target = $region3
  $region8: #{batch_net_forward.3} parent=0 // loop_exit
    _

// kernel: batch_net_forward.4
$region0: #{batch_net_forward.4}
  #allocation0 [shape = 'u32[]', space=smem, size = 0x4, offset = 0x4, fixed_abs, tag = 'smem constant byte address 0x4 - core index']
  #allocation1 [shape = 'u32[144,128]{1,0:T(1,128)}', space=vmem, size = 0x12000, scoped, tag = 'internal scratch']
  %s0 = inlined_call_operand.vmem [shape: f32[256,128], index: 0, kind: input, shape index: {}]
  %s1 = inlined_call_operand.vmem [shape: f32[2,128], index: 1, kind: input, shape index: {}]
  %s2 = inlined_call_operand.vmem [shape: f32[128,128], index: 2, kind: input, shape index: {}]
  %s3 = inlined_call_operand.vmem [shape: f32[256,128], index: 3, kind: output, shape index: {0}]
  %s4 = inlined_call_operand.vmem [shape: f32[2,128], index: 4, kind: output, shape index: {1}]
  %5 = xla_tuple %s3, %s4
  %s6 = sld [smem:[#allocation0]]
  $region57: #{batch_net_forward.4} parent=0
    _
  %s8 = ssub.s32 1, %s6
  %s9 = scalar_select 0, %s8, %s6
  loop: start=0, step=1, limit=6
  $region2: #{batch_net_forward.4} parent=0 // loop_pre_header
    _
  $region3: #{batch_net_forward.4} parent=0 // loop_header
    %s11 = sphi 0, %s15
    %p12 = scmp.ge.s32.totalorder %s11, 6
    %s21 = sphi 0, %s23
    %s24 = sphi 0, %s21
    %s25 = sphi 0, %s24
    %s41 = sphi 0, %s25
    %s45 = sphi 0, %s45
    %s47 = sphi 0, %s45
    %s48 = sphi 0, %s47
    %s62 = sphi 0, %s48
    %s66 = sphi 0, %s66
    %s68 = sphi 0, %s66
    %s69 = sphi 0, %s68
    %s83 = sphi 0, %s69
    %s89 = sphi 0, %s91
    %s92 = sphi 0, %s89
    %s93 = sphi 0, %s92
    %s109 = sphi 0, %s93
    %s113 = sphi 0, %s113
    %s115 = sphi 0, %s113
    %s116 = sphi 0, %s115
    %s130 = sphi 0, %s116
  $region4: #{batch_net_forward.4} parent=0 // loop_header_branch
    %14 = sbr.rel (%p12) target = $region8
  $region5: #{batch_net_forward.4} parent=0 // loop_body
    %s16 = ssub.s32 %s11, 1
    %s17 = ssub.s32 %s11, 2
    %s18 = sadd.s32 %s11, 1
    %s19 = ssub.s32 %s11, %s18
    %p20 = scmp.eq.s32.totalorder %s19, 0
    %s22 = sadd.s32 %s21, 1
    %s23 = scalar_select %p20, %s21, %s22
    %p26 = pneg %p20
    %p27 = scmp.eq.s32.totalorder %s11, 3
    %p28 = por %p26, %p27
    %p29 = scmp.ne.s32.totalorder %s21, %s24
    %p30 = scmp.eq.s32.totalorder %s11, 0
    %p31 = por %p29, %p30
    %p32 = scmp.ne.s32.totalorder %s21, %s24
    %p33 = scmp.eq.s32.totalorder %s16, 3
    %p34 = por %p32, %p33
    %p35 = scmp.ne.s32.totalorder %s24, %s25
    %p36 = scmp.eq.s32.totalorder %s16, 0
    %p37 = por %p35, %p36
    %p38 = scmp.ne.s32.totalorder %s24, %s25
    %p39 = scmp.eq.s32.totalorder %s17, 3
    %p40 = por %p38, %p39
    %p42 = scmp.ne.s32.totalorder %s25, %s41
    %p43 = scmp.eq.s32.totalorder %s17, 0
    %p44 = por %p42, %p43
    %s46 = sadd.s32 %s45, 1
    %p49 = scmp.eq.s32.totalorder %s11, 3
    %p50 = scmp.ne.s32.totalorder %s45, %s47
    %p51 = scmp.eq.s32.totalorder %s11, 0
    %p52 = por %p50, %p51
    %p53 = scmp.ne.s32.totalorder %s45, %s47
    %p54 = scmp.eq.s32.totalorder %s16, 3
    %p55 = por %p53, %p54
    %p56 = scmp.ne.s32.totalorder %s47, %s48
    %p57 = scmp.eq.s32.totalorder %s16, 0
    %p58 = por %p56, %p57
    %p59 = scmp.ne.s32.totalorder %s47, %s48
    %p60 = scmp.eq.s32.totalorder %s17, 3
    %p61 = por %p59, %p60
    %p63 = scmp.ne.s32.totalorder %s48, %s62
    %p64 = scmp.eq.s32.totalorder %s17, 0
    %p65 = por %p63, %p64
    %s67 = sadd.s32 %s66, 1
    %p70 = scmp.eq.s32.totalorder %s11, 3
    %p71 = scmp.ne.s32.totalorder %s66, %s68
    %p72 = scmp.eq.s32.totalorder %s11, 0
    %p73 = por %p71, %p72
    %p74 = scmp.ne.s32.totalorder %s66, %s68
    %p75 = scmp.eq.s32.totalorder %s16, 3
    %p76 = por %p74, %p75
    %p77 = scmp.ne.s32.totalorder %s68, %s69
    %p78 = scmp.eq.s32.totalorder %s16, 0
    %p79 = por %p77, %p78
    %p80 = scmp.ne.s32.totalorder %s68, %s69
    %p81 = scmp.eq.s32.totalorder %s17, 3
    %p82 = por %p80, %p81
    %p84 = scmp.ne.s32.totalorder %s69, %s83
    %p85 = scmp.eq.s32.totalorder %s17, 0
    %p86 = por %p84, %p85
    %s87 = ssub.s32 %s11, %s18
    %p88 = scmp.eq.s32.totalorder %s87, 0
    %s90 = sadd.s32 %s89, 1
    %s91 = scalar_select %p88, %s89, %s90
    %p94 = pneg %p88
    %p95 = scmp.eq.s32.totalorder %s11, 3
    %p96 = por %p94, %p95
    %p97 = scmp.ne.s32.totalorder %s89, %s92
    %p98 = scmp.eq.s32.totalorder %s11, 0
    %p99 = por %p97, %p98
    %p100 = scmp.ne.s32.totalorder %s89, %s92
    %p101 = scmp.eq.s32.totalorder %s16, 3
    %p102 = por %p100, %p101
    %p103 = scmp.ne.s32.totalorder %s92, %s93
    %p104 = scmp.eq.s32.totalorder %s16, 0
    %p105 = por %p103, %p104
    %p106 = scmp.ne.s32.totalorder %s92, %s93
    %p107 = scmp.eq.s32.totalorder %s17, 3
    %p108 = por %p106, %p107
    %p110 = scmp.ne.s32.totalorder %s93, %s109
    %p111 = scmp.eq.s32.totalorder %s17, 0
    %p112 = por %p110, %p111
    %s114 = sadd.s32 %s113, 1
    %p117 = scmp.eq.s32.totalorder %s11, 3
    %p118 = scmp.ne.s32.totalorder %s113, %s115
    %p119 = scmp.eq.s32.totalorder %s11, 0
    %p120 = por %p118, %p119
    %p121 = scmp.ne.s32.totalorder %s113, %s115
    %p122 = scmp.eq.s32.totalorder %s16, 3
    %p123 = por %p121, %p122
    %p124 = scmp.ne.s32.totalorder %s115, %s116
    %p125 = scmp.eq.s32.totalorder %s16, 0
    %p126 = por %p124, %p125
    %p127 = scmp.ne.s32.totalorder %s115, %s116
    %p128 = scmp.eq.s32.totalorder %s17, 3
    %p129 = por %p127, %p128
    %p131 = scmp.ne.s32.totalorder %s116, %s130
    %p132 = scmp.eq.s32.totalorder %s17, 0
    %p133 = por %p131, %p132
    %p134 = scmp.le.s32.totalorder 1, %s11
    %p135 = scmp.lt.s32.totalorder %s11, 5
    %p136 = pnand %p134, %p135
    %p137 = pneg %p136
    // Predicated region
    $region9: #{batch_net_forward.4} parent=5 // pred_check
      _
    $region10: #{batch_net_forward.4} parent=5 // pred_check_branch
      %139 = sbr.rel (%p136) target = $region12
    $region11: #{batch_net_forward.4} parent=5 // pred_region
      %s140 = ssub.s32 %s11, 1
      // Predicated region
      $region13: #{batch_net_forward.4} parent=11 // pred_check
        %p141 = pneg %p58
      $region14: #{batch_net_forward.4} parent=11 // pred_check_branch
        %143 = sbr.rel (%p141) target = $region16
      $region15: #{batch_net_forward.4} parent=11 // pred_region
        _
      $region16: #{batch_net_forward.4} parent=11 // pred_fallthru
        _
      // Predicated region
      $region17: #{batch_net_forward.4} parent=11 // pred_check
        %p144 = pneg %p79
      $region18: #{batch_net_forward.4} parent=11 // pred_check_branch
        %146 = sbr.rel (%p144) target = $region20
      $region19: #{batch_net_forward.4} parent=11 // pred_region
        _
      $region20: #{batch_net_forward.4} parent=11 // pred_fallthru
        _
    $region12: #{batch_net_forward.4} parent=5 // pred_fallthru
      _
    %p147 = scmp.lt.s32.totalorder %s11, 4
    // Predicated region
    $region21: #{batch_net_forward.4} parent=5 // pred_check
      %p148 = pneg %p147
    $region22: #{batch_net_forward.4} parent=5 // pred_check_branch
      %150 = sbr.rel (%p148) target = $region24
    $region23: #{batch_net_forward.4} parent=5 // pred_region
      // Predicated region
      $region25: #{batch_net_forward.4} parent=23 // pred_check
        %p151 = pneg %p31
      $region26: #{batch_net_forward.4} parent=23 // pred_check_branch
        %153 = sbr.rel (%p151) target = $region28
      $region27: #{batch_net_forward.4} parent=23 // pred_region
        %s154 = smul.u32 8, %s11
        %p155 = scmp.lt.s32.totalorder %s154, 31
        %s156 = scalar_select %p155, %s154, 31
        %s157 = smul.addr %s156, 8
        %s158 = scalar_lea.vmem %s0, %s157
        %s159 = smul.u32 8, %s11
      $region28: #{batch_net_forward.4} parent=23 // pred_fallthru
        _
    $region24: #{batch_net_forward.4} parent=5 // pred_fallthru
      _
    %p160 = scmp.le.s32.totalorder 1, %s11
    %p161 = scmp.lt.s32.totalorder %s11, 5
    %p162 = pnand %p160, %p161
    %p163 = pneg %p162
    // Predicated region
    $region29: #{batch_net_forward.4} parent=5 // pred_check
      _
    $region30: #{batch_net_forward.4} parent=5 // pred_check_branch
      %165 = sbr.rel (%p162) target = $region32
    $region31: #{batch_net_forward.4} parent=5 // pred_region
      %s166 = ssub.s32 %s11, 1
      %s167 = smul.u32 8, %s16
      %p168 = scmp.lt.s32.totalorder %s167, 31
      %s169 = scalar_select %p168, %s167, 31
      %s170 = smul.addr %s169, 8
      %s171 = scalar_lea.vmem %s0, %s170
      %p172 = pneg %p37
      %p173 = pneg %p34
      %p174 = pneg %p58
      %p175 = pneg %p55
      %p176 = pneg %p79
      %p177 = pneg %p76
      %p178 = pneg %p105
      %p179 = pneg %p102
      %s180 = smul.u32 8, %s16
      %p181 = scmp.lt.s32.totalorder %s180, 31
      %s182 = scalar_select %p181, %s180, 31
      %s183 = smul.addr %s182, 8
      %s184 = scalar_lea.vmem %s3, %s183
      %p185 = pneg %p126
      %p186 = pneg %p123
      %s187 = smul.u32 8, %s16
      %p188 = scmp.lt.s32.totalorder %s187, 31
      %s189 = scalar_select %p188, %s187, 31
      %s190 = smul.addr %s189, 8
      %s191 = scalar_lea.vmem %s0, %s190
      %s192 = smul.u32 8, %s16
      %s193 = smul.u32 8, %s16
      %p194 = scmp.lt.s32.totalorder %s193, 31
      %s195 = scalar_select %p194, %s193, 31
      %s196 = smul.addr %s195, 8
      %s197 = scalar_lea.vmem %s3, %s196
      %s198 = smul.u32 8, %s16
      %v199 = vld [vmem:[%s191] sm:$0xff]
      %v200 = vld [vmem:[%s191 + $0x8] sm:$0xff]
      %v201 = vld [vmem:[%s191 + $0x10] sm:$0xff]
      %v202 = vld [vmem:[%s191 + $0x18] sm:$0xff]
      %v203 = vld [vmem:[%s191 + $0x20] sm:$0xff]
      %v204 = vld [vmem:[%s191 + $0x28] sm:$0xff]
      %v205 = vld [vmem:[%s191 + $0x30] sm:$0xff]
      %v206 = vld [vmem:[%s191 + $0x38] sm:$0xff]
      %v207 = vld [vmem:[%s1] sm:$0x1]
      %v208 = vlaneseq
      %v209 = vshrl.u32 %v208, 7
      %v210 = vsub.s32 0, %v209
      %v211 = vrot.slane %v207, %v210
      %v212 = vmul.f32 %v199, %v211
      %v213 = vmul.f32 %v200, %v211
      %v214 = vmul.f32 %v201, %v211
      %v215 = vmul.f32 %v202, %v211
      %v216 = vmul.f32 %v203, %v211
      %v217 = vmul.f32 %v204, %v211
      %v218 = vmul.f32 %v205, %v211
      %v219 = vmul.f32 %v206, %v211
      %v220 = vld [vmem:[%s1 + $0x1] sm:$0x1]
      %v221 = vlaneseq
      %v222 = vshrl.u32 %v221, 7
      %v223 = vsub.s32 0, %v222
      %v224 = vrot.slane %v220, %v223
      %v225 = vadd.f32 %v212, %v224
      %v226 = vadd.f32 %v213, %v224
      %v227 = vadd.f32 %v214, %v224
      %v228 = vadd.f32 %v215, %v224
      %v229 = vadd.f32 %v216, %v224
      %v230 = vadd.f32 %v217, %v224
      %v231 = vadd.f32 %v218, %v224
      %v232 = vadd.f32 %v219, %v224
      %v233 = vmax.f32 %v225, 0.0
      %v234 = vmax.f32 %v226, 0.0
      %v235 = vmax.f32 %v227, 0.0
      %v236 = vmax.f32 %v228, 0.0
      %v237 = vmax.f32 %v229, 0.0
      %v238 = vmax.f32 %v230, 0.0
      %v239 = vmax.f32 %v231, 0.0
      %v240 = vmax.f32 %v232, 0.0
      %s241 = smul.u32 %s16, 64
      %v242 = vlaneseq
      %v243 = vshrl.u32 %v242, 7
      %v244 = vadd.s32 %v243, 8
      %v245 = vadd.s32 %v243, 16
      %v246 = vadd.s32 %v243, 24
      %v247 = vadd.s32 %v243, 32
      %v248 = vadd.s32 %v243, 40
      %v249 = vadd.s32 %v243, 48
      %v250 = vadd.s32 %v243, 56
      %v251 = vstv %s241
      %v252 = vadd.s32 %v251, %v243
      %v253 = vadd.s32 %v251, %v244
      %v254 = vadd.s32 %v251, %v245
      %v255 = vadd.s32 %v251, %v246
      %v256 = vadd.s32 %v251, %v247
      %v257 = vadd.s32 %v251, %v248
      %v258 = vadd.s32 %v251, %v249
      %v259 = vadd.s32 %v251, %v250
      %vm260 = vcmp.lt.s32.totalorder %v252, 200
      %vm261 = vcmp.lt.s32.totalorder %v253, 200
      %vm262 = vcmp.lt.s32.totalorder %v254, 200
      %vm263 = vcmp.lt.s32.totalorder %v255, 200
      %vm264 = vcmp.lt.s32.totalorder %v256, 200
      %vm265 = vcmp.lt.s32.totalorder %v257, 200
      %vm266 = vcmp.lt.s32.totalorder %v258, 200
      %vm267 = vcmp.lt.s32.totalorder %v259, 200
      %v268 = vsel %vm260, %v233, 0.0
      %v269 = vsel %vm261, %v234, 0.0
      %v270 = vsel %vm262, %v235, 0.0
      %v271 = vsel %vm263, %v236, 0.0
      %v272 = vsel %vm264, %v237, 0.0
      %v273 = vsel %vm265, %v238, 0.0
      %v274 = vsel %vm266, %v239, 0.0
      %v275 = vsel %vm267, %v240, 0.0
      %v276 = vld [vmem:[%s2] sm:$0xff]
      %v277 = vld [vmem:[%s2 + $0x8] sm:$0xff]
      %v278 = vld [vmem:[%s2 + $0x10] sm:$0xff]
      %v279 = vld [vmem:[%s2 + $0x18] sm:$0xff]
      %v280 = vld [vmem:[%s2 + $0x20] sm:$0xff]
      %v281 = vld [vmem:[%s2 + $0x28] sm:$0xff]
      %v282 = vld [vmem:[%s2 + $0x30] sm:$0xff]
      %v283 = vld [vmem:[%s2 + $0x38] sm:$0xff]
      %v284 = vld [vmem:[%s2 + $0x40] sm:$0xff]
      %v285 = vld [vmem:[%s2 + $0x48] sm:$0xff]
      %v286 = vld [vmem:[%s2 + $0x50] sm:$0xff]
      %v287 = vld [vmem:[%s2 + $0x58] sm:$0xff]
      %v288 = vld [vmem:[%s2 + $0x60] sm:$0xff]
      %v289 = vld [vmem:[%s2 + $0x68] sm:$0xff]
      %v290 = vld [vmem:[%s2 + $0x70] sm:$0xff]
      %v291 = vld [vmem:[%s2 + $0x78] sm:$0xff]
      %292 = vmatprep.subr.mxu0 0.0
      %293 = vmatpush1.msra.mxu0 %v276
      %294 = vmatprep.subr.mxu0 0.0
      %295 = vmatpush1.msra.mxu0 %v277
      %296 = vmatprep.subr.mxu0 0.0
      %297 = vmatpush1.msra.mxu0 %v278
      %298 = vmatprep.subr.mxu0 0.0
      %299 = vmatpush1.msra.mxu0 %v279
      %300 = vmatprep.subr.mxu0 0.0
      %301 = vmatpush1.msra.mxu0 %v280
      %302 = vmatprep.subr.mxu0 0.0
      %303 = vmatpush1.msra.mxu0 %v281
      %304 = vmatprep.subr.mxu0 0.0
      %305 = vmatpush1.msra.mxu0 %v282
      %306 = vmatprep.subr.mxu0 0.0
      %307 = vmatpush1.msra.mxu0 %v283
      %308 = vmatprep.subr.mxu0 0.0
      %309 = vmatpush1.msra.mxu0 %v284
      %310 = vmatprep.subr.mxu0 0.0
      %311 = vmatpush1.msra.mxu0 %v285
      %312 = vmatprep.subr.mxu0 0.0
      %313 = vmatpush1.msra.mxu0 %v286
      %314 = vmatprep.subr.mxu0 0.0
      %315 = vmatpush1.msra.mxu0 %v287
      %316 = vmatprep.subr.mxu0 0.0
      %317 = vmatpush1.msra.mxu0 %v288
      %318 = vmatprep.subr.mxu0 0.0
      %319 = vmatpush1.msra.mxu0 %v289
      %320 = vmatprep.subr.mxu0 0.0
      %321 = vmatpush1.msra.mxu0 %v290
      %322 = vmatprep.subr.mxu0 0.0
      %323 = vmatpush1.msra.mxu0 %v291
      %324 = vmatprep.subr.mxu0 0.0
      %325 = vmatpush1.msra.mxu0 0.0
      %326 = vmatprep.subr.mxu0 0.0
      %327 = vmatpush1.msra.mxu0 0.0
      %328 = vmatprep.subr.mxu0 0.0
      %329 = vmatpush1.msra.mxu0 0.0
      %330 = vmatprep.subr.mxu0 0.0
      %331 = vmatpush1.msra.mxu0 0.0
      %332 = vmatprep.subr.mxu0 0.0
      %333 = vmatpush1.msra.mxu0 0.0
      %334 = vmatprep.subr.mxu0 0.0
      %335 = vmatpush1.msra.mxu0 0.0
      %336 = vmatprep.subr.mxu0 0.0
      %337 = vmatpush1.msra.mxu0 0.0
      %338 = vmatprep.subr.mxu0 0.0
      %339 = vmatpush1.msra.mxu0 0.0
      %340 = vmatprep.subr.mxu0 0.0
      %341 = vmatpush1.msra.mxu0 0.0
      %342 = vmatprep.subr.mxu0 0.0
      %343 = vmatpush1.msra.mxu0 0.0
      %344 = vmatprep.subr.mxu0 0.0
      %345 = vmatpush1.msra.mxu0 0.0
      %346 = vmatprep.subr.mxu0 0.0
      %347 = vmatpush1.msra.mxu0 0.0
      %348 = vmatprep.subr.mxu0 0.0
      %349 = vmatpush1.msra.mxu0 0.0
      %350 = vmatprep.subr.mxu0 0.0
      %351 = vmatpush1.msra.mxu0 0.0
      %352 = vmatprep.subr.mxu0 0.0
      %353 = vmatpush1.msra.mxu0 0.0
      %354 = vmatprep.subr.mxu0 0.0
      %355 = vmatpush1.msra.mxu0 0.0
      %356 = vmatprep.mubr.f32.mxu0 0.0
      %357 = vmatmul.mubr.f32.gmra.mrb[0].mxu0 %v268
      %v358 = vpop.f32.mrb[0].mxu0
      %v359 = vadd.f32 0.0, %v358
      %v360 = vpop.f32.mrb[0].mxu0
      %361 = vmatprep.mubr.f32.mxu0 0.0
      %362 = vmatmul.mubr.f32.gmra.mrb[0].mxu0 %v269
      %v363 = vpop.f32.mrb[0].mxu0
      %v364 = vadd.f32 0.0, %v363
      %v365 = vpop.f32.mrb[0].mxu0
      %366 = vmatprep.mubr.f32.mxu0 0.0
      %367 = vmatmul.mubr.f32.gmra.mrb[0].mxu0 %v270
      %v368 = vpop.f32.mrb[0].mxu0
      %v369 = vadd.f32 0.0, %v368
      %v370 = vpop.f32.mrb[0].mxu0
      %371 = vmatprep.mubr.f32.mxu0 0.0
      %372 = vmatmul.mubr.f32.gmra.mrb[0].mxu0 %v271
      %v373 = vpop.f32.mrb[0].mxu0
      %v374 = vadd.f32 0.0, %v373
      %v375 = vpop.f32.mrb[0].mxu0
      %376 = vmatprep.mubr.f32.mxu0 0.0
      %377 = vmatmul.mubr.f32.gmra.mrb[0].mxu0 %v272
      %v378 = vpop.f32.mrb[0].mxu0
      %v379 = vadd.f32 0.0, %v378
      %v380 = vpop.f32.mrb[0].mxu0
      %381 = vmatprep.mubr.f32.mxu0 0.0
      %382 = vmatmul.mubr.f32.gmra.mrb[0].mxu0 %v273
      %v383 = vpop.f32.mrb[0].mxu0
      %v384 = vadd.f32 0.0, %v383
      %v385 = vpop.f32.mrb[0].mxu0
      %386 = vmatprep.mubr.f32.mxu0 0.0
      %387 = vmatmul.mubr.f32.gmra.mrb[0].mxu0 %v274
      %v388 = vpop.f32.mrb[0].mxu0
      %v389 = vadd.f32 0.0, %v388
      %v390 = vpop.f32.mrb[0].mxu0
      %391 = vmatprep.mubr.f32.mxu0 0.0
      %392 = vmatmul.mubr.f32.gmra.mrb[0].mxu0 %v275
      %v393 = vpop.f32.mrb[0].mxu0
      %v394 = vadd.f32 0.0, %v393
      %v395 = vpop.f32.mrb[0].mxu0
      %396 = vdwg.mxu0
      %397 = vst [vmem:[%s197] sm:$0xff] %v359
      %398 = vst [vmem:[%s197 + $0x8] sm:$0xff] %v364
      %399 = vst [vmem:[%s197 + $0x10] sm:$0xff] %v369
      %400 = vst [vmem:[%s197 + $0x18] sm:$0xff] %v374
      %401 = vst [vmem:[%s197 + $0x20] sm:$0xff] %v379
      %402 = vst [vmem:[%s197 + $0x28] sm:$0xff] %v384
      %403 = vst [vmem:[%s197 + $0x30] sm:$0xff] %v389
      %404 = vst [vmem:[%s197 + $0x38] sm:$0xff] %v394
      %v405 = vadd.f32 %v359, %v364
      %v406 = vadd.f32 %v405, %v369
      %v407 = vadd.f32 %v406, %v374
      %v408 = vadd.f32 %v407, %v379
      %v409 = vadd.f32 %v408, %v384
      %v410 = vadd.f32 %v409, %v389
      %v411 = vadd.f32 %v410, %v394
      %v412 = vrot.slane %v411, 4
      %v413 = vadd.f32 %v411, %v412
      %v414 = vrot.slane %v413, 2
      %v415 = vadd.f32 %v413, %v414
      %v416 = vrot.slane %v415, 1
      %v417 = vadd.f32 %v415, %v416
      %v418 = vmul.f32 %v359, %v359
      %v419 = vmul.f32 %v364, %v364
      %v420 = vmul.f32 %v369, %v369
      %v421 = vmul.f32 %v374, %v374
      %v422 = vmul.f32 %v379, %v379
      %v423 = vmul.f32 %v384, %v384
      %v424 = vmul.f32 %v389, %v389
      %v425 = vmul.f32 %v394, %v394
      %v426 = vadd.f32 %v418, %v419
      %v427 = vadd.f32 %v426, %v420
      %v428 = vadd.f32 %v427, %v421
      %v429 = vadd.f32 %v428, %v422
      %v430 = vadd.f32 %v429, %v423
      %v431 = vadd.f32 %v430, %v424
      %v432 = vadd.f32 %v431, %v425
      %v433 = vrot.slane %v432, 4
      %v434 = vadd.f32 %v432, %v433
      %v435 = vrot.slane %v434, 2
      %v436 = vadd.f32 %v434, %v435
      %v437 = vrot.slane %v436, 1
      %v438 = vadd.f32 %v436, %v437
      %vm439 = vcmask 1040384
      %v440 = vsel %vm439, %v417, %v438
      %p441 = scmp.eq.s32.totalorder %s16, 0
      // Predicated region
      $region33: #{batch_net_forward.4} parent=31 // pred_check
        %p442 = pneg %p441
      $region34: #{batch_net_forward.4} parent=31 // pred_check_branch
        %444 = sbr.rel (%p442) target = $region36
      $region35: #{batch_net_forward.4} parent=31 // pred_region
        %445 = vst [vmem:[%s4] sm:$0x3] 0.0
      $region36: #{batch_net_forward.4} parent=31 // pred_fallthru
        _
      %v446 = vld [vmem:[%s4] sm:$0x3]
      %v447 = vadd.f32 %v446, %v440
      %448 = vst [vmem:[%s4] sm:$0x3] %v447
      %s449 = smul.u32 8, %s16
      %p450 = scmp.lt.s32.totalorder %s449, 31
      %s451 = scalar_select %p450, %s449, 31
      %s452 = smul.addr %s451, 8
      %s453 = scalar_lea.vmem %s3, %s452
      // Predicated region
      $region37: #{batch_net_forward.4} parent=31 // pred_check
        %p454 = pneg %p102
      $region38: #{batch_net_forward.4} parent=31 // pred_check_branch
        %456 = sbr.rel (%p454) target = $region40
      $region39: #{batch_net_forward.4} parent=31 // pred_region
        %s457 = smul.u32 8, %s16
      $region40: #{batch_net_forward.4} parent=31 // pred_fallthru
        _
      // Predicated region
      $region41: #{batch_net_forward.4} parent=31 // pred_check
        %p458 = pneg %p123
      $region42: #{batch_net_forward.4} parent=31 // pred_check_branch
        %460 = sbr.rel (%p458) target = $region44
      $region43: #{batch_net_forward.4} parent=31 // pred_region
        _
      $region44: #{batch_net_forward.4} parent=31 // pred_fallthru
        _
      // Predicated region
      $region45: #{batch_net_forward.4} parent=31 // pred_check
        %p461 = pneg %p123
      $region46: #{batch_net_forward.4} parent=31 // pred_check_branch
        %463 = sbr.rel (%p461) target = $region48
      $region47: #{batch_net_forward.4} parent=31 // pred_region
        _
      $region48: #{batch_net_forward.4} parent=31 // pred_fallthru
        _
    $region32: #{batch_net_forward.4} parent=5 // pred_fallthru
      _
    %p464 = scmp.le.s32.totalorder 2, %s11
    // Predicated region
    $region49: #{batch_net_forward.4} parent=5 // pred_check
      %p465 = pneg %p464
    $region50: #{batch_net_forward.4} parent=5 // pred_check_branch
      %467 = sbr.rel (%p465) target = $region52
    $region51: #{batch_net_forward.4} parent=5 // pred_region
      %s468 = ssub.s32 %s11, 2
      // Predicated region
      $region53: #{batch_net_forward.4} parent=51 // pred_check
        %p469 = pneg %p108
      $region54: #{batch_net_forward.4} parent=51 // pred_check_branch
        %471 = sbr.rel (%p469) target = $region56
      $region55: #{batch_net_forward.4} parent=51 // pred_region
        %s472 = smul.u32 8, %s17
        %p473 = scmp.lt.s32.totalorder %s472, 31
        %s474 = scalar_select %p473, %s472, 31
        %s475 = smul.addr %s474, 8
        %s476 = scalar_lea.vmem %s3, %s475
      $region56: #{batch_net_forward.4} parent=51 // pred_fallthru
        _
    $region52: #{batch_net_forward.4} parent=5 // pred_fallthru
      _
  $region6: #{batch_net_forward.4} parent=0 // loop_footer
    %s15 = sadd.s32 1, %s11
  $region7: #{batch_net_forward.4} parent=0 // loop_footer_branch
    %10 = sbr.rel target = $region3
  $region8: #{batch_net_forward.4} parent=0 // loop_exit
    _

// kernel: batch_net_forward.5
$region0: #{batch_net_forward.5}
  #allocation0 [shape = 'u32[]', space=smem, size = 0x4, offset = 0x4, fixed_abs, tag = 'smem constant byte address 0x4 - core index']
  #allocation1 [shape = 'u32[144,128]{1,0:T(1,128)}', space=vmem, size = 0x12000, scoped, tag = 'internal scratch']
  %s0 = inlined_call_operand.vmem [shape: f32[256,128], index: 0, kind: input, shape index: {}]
  %s1 = inlined_call_operand.vmem [shape: f32[2,128], index: 1, kind: input, shape index: {}]
  %s2 = inlined_call_operand.vmem [shape: f32[128,128], index: 2, kind: input, shape index: {}]
  %s3 = inlined_call_operand.vmem [shape: f32[1,128], index: 3, kind: input, shape index: {}]
  %s4 = inlined_call_operand.vmem [shape: f32[256,128], index: 4, kind: output, shape index: {}]
  %s5 = sld [smem:[#allocation0]]
  $region49: #{batch_net_forward.5} parent=0
    _
  %s7 = ssub.s32 1, %s5
  %s8 = scalar_select 0, %s7, %s5
  loop: start=0, step=1, limit=6
  $region2: #{batch_net_forward.5} parent=0 // loop_pre_header
    _
  $region3: #{batch_net_forward.5} parent=0 // loop_header
    %s10 = sphi 0, %s14
    %p11 = scmp.ge.s32.totalorder %s10, 6
    %s20 = sphi 0, %s22
    %s23 = sphi 0, %s20
    %s24 = sphi 0, %s23
    %s40 = sphi 0, %s24
    %s44 = sphi 0, %s44
    %s46 = sphi 0, %s44
    %s47 = sphi 0, %s46
    %s61 = sphi 0, %s47
    %s65 = sphi 0, %s65
    %s67 = sphi 0, %s65
    %s68 = sphi 0, %s67
    %s82 = sphi 0, %s68
    %s86 = sphi 0, %s86
    %s88 = sphi 0, %s86
    %s89 = sphi 0, %s88
    %s103 = sphi 0, %s89
    %s109 = sphi 0, %s111
    %s112 = sphi 0, %s109
    %s113 = sphi 0, %s112
    %s129 = sphi 0, %s113
  $region4: #{batch_net_forward.5} parent=0 // loop_header_branch
    %13 = sbr.rel (%p11) target = $region8
  $region5: #{batch_net_forward.5} parent=0 // loop_body
    %s15 = ssub.s32 %s10, 1
    %s16 = ssub.s32 %s10, 2
    %s17 = sadd.s32 %s10, 1
    %s18 = ssub.s32 %s10, %s17
    %p19 = scmp.eq.s32.totalorder %s18, 0
    %s21 = sadd.s32 %s20, 1
    %s22 = scalar_select %p19, %s20, %s21
    %p25 = pneg %p19
    %p26 = scmp.eq.s32.totalorder %s10, 3
    %p27 = por %p25, %p26
    %p28 = scmp.ne.s32.totalorder %s20, %s23
    %p29 = scmp.eq.s32.totalorder %s10, 0
    %p30 = por %p28, %p29
    %p31 = scmp.ne.s32.totalorder %s20, %s23
    %p32 = scmp.eq.s32.totalorder %s15, 3
    %p33 = por %p31, %p32
    %p34 = scmp.ne.s32.totalorder %s23, %s24
    %p35 = scmp.eq.s32.totalorder %s15, 0
    %p36 = por %p34, %p35
    %p37 = scmp.ne.s32.totalorder %s23, %s24
    %p38 = scmp.eq.s32.totalorder %s16, 3
    %p39 = por %p37, %p38
    %p41 = scmp.ne.s32.totalorder %s24, %s40
    %p42 = scmp.eq.s32.totalorder %s16, 0
    %p43 = por %p41, %p42
    %s45 = sadd.s32 %s44, 1
    %p48 = scmp.eq.s32.totalorder %s10, 3
    %p49 = scmp.ne.s32.totalorder %s44, %s46
    %p50 = scmp.eq.s32.totalorder %s10, 0
    %p51 = por %p49, %p50
    %p52 = scmp.ne.s32.totalorder %s44, %s46
    %p53 = scmp.eq.s32.totalorder %s15, 3
    %p54 = por %p52, %p53
    %p55 = scmp.ne.s32.totalorder %s46, %s47
    %p56 = scmp.eq.s32.totalorder %s15, 0
    %p57 = por %p55, %p56
    %p58 = scmp.ne.s32.totalorder %s46, %s47
    %p59 = scmp.eq.s32.totalorder %s16, 3
    %p60 = por %p58, %p59
    %p62 = scmp.ne.s32.totalorder %s47, %s61
    %p63 = scmp.eq.s32.totalorder %s16, 0
    %p64 = por %p62, %p63
    %s66 = sadd.s32 %s65, 1
    %p69 = scmp.eq.s32.totalorder %s10, 3
    %p70 = scmp.ne.s32.totalorder %s65, %s67
    %p71 = scmp.eq.s32.totalorder %s10, 0
    %p72 = por %p70, %p71
    %p73 = scmp.ne.s32.totalorder %s65, %s67
    %p74 = scmp.eq.s32.totalorder %s15, 3
    %p75 = por %p73, %p74
    %p76 = scmp.ne.s32.totalorder %s67, %s68
    %p77 = scmp.eq.s32.totalorder %s15, 0
    %p78 = por %p76, %p77
    %p79 = scmp.ne.s32.totalorder %s67, %s68
    %p80 = scmp.eq.s32.totalorder %s16, 3
    %p81 = por %p79, %p80
    %p83 = scmp.ne.s32.totalorder %s68, %s82
    %p84 = scmp.eq.s32.totalorder %s16, 0
    %p85 = por %p83, %p84
    %s87 = sadd.s32 %s86, 1
    %p90 = scmp.eq.s32.totalorder %s10, 3
    %p91 = scmp.ne.s32.totalorder %s86, %s88
    %p92 = scmp.eq.s32.totalorder %s10, 0
    %p93 = por %p91, %p92
    %p94 = scmp.ne.s32.totalorder %s86, %s88
    %p95 = scmp.eq.s32.totalorder %s15, 3
    %p96 = por %p94, %p95
    %p97 = scmp.ne.s32.totalorder %s88, %s89
    %p98 = scmp.eq.s32.totalorder %s15, 0
    %p99 = por %p97, %p98
    %p100 = scmp.ne.s32.totalorder %s88, %s89
    %p101 = scmp.eq.s32.totalorder %s16, 3
    %p102 = por %p100, %p101
    %p104 = scmp.ne.s32.totalorder %s89, %s103
    %p105 = scmp.eq.s32.totalorder %s16, 0
    %p106 = por %p104, %p105
    %s107 = ssub.s32 %s10, %s17
    %p108 = scmp.eq.s32.totalorder %s107, 0
    %s110 = sadd.s32 %s109, 1
    %s111 = scalar_select %p108, %s109, %s110
    %p114 = pneg %p108
    %p115 = scmp.eq.s32.totalorder %s10, 3
    %p116 = por %p114, %p115
    %p117 = scmp.ne.s32.totalorder %s109, %s112
    %p118 = scmp.eq.s32.totalorder %s10, 0
    %p119 = por %p117, %p118
    %p120 = scmp.ne.s32.totalorder %s109, %s112
    %p121 = scmp.eq.s32.totalorder %s15, 3
    %p122 = por %p120, %p121
    %p123 = scmp.ne.s32.totalorder %s112, %s113
    %p124 = scmp.eq.s32.totalorder %s15, 0
    %p125 = por %p123, %p124
    %p126 = scmp.ne.s32.totalorder %s112, %s113
    %p127 = scmp.eq.s32.totalorder %s16, 3
    %p128 = por %p126, %p127
    %p130 = scmp.ne.s32.totalorder %s113, %s129
    %p131 = scmp.eq.s32.totalorder %s16, 0
    %p132 = por %p130, %p131
    %p133 = scmp.le.s32.totalorder 1, %s10
    %p134 = scmp.lt.s32.totalorder %s10, 5
    %p135 = pnand %p133, %p134
    %p136 = pneg %p135
    // Predicated region
    $region9: #{batch_net_forward.5} parent=5 // pred_check
      _
    $region10: #{batch_net_forward.5} parent=5 // pred_check_branch
      %138 = sbr.rel (%p135) target = $region12
    $region11: #{batch_net_forward.5} parent=5 // pred_region
      %s139 = ssub.s32 %s10, 1
      // Predicated region
      $region13: #{batch_net_forward.5} parent=11 // pred_check
        %p140 = pneg %p57
      $region14: #{batch_net_forward.5} parent=11 // pred_check_branch
        %142 = sbr.rel (%p140) target = $region16
      $region15: #{batch_net_forward.5} parent=11 // pred_region
        _
      $region16: #{batch_net_forward.5} parent=11 // pred_fallthru
        _
      // Predicated region
      $region17: #{batch_net_forward.5} parent=11 // pred_check
        %p143 = pneg %p78
      $region18: #{batch_net_forward.5} parent=11 // pred_check_branch
        %145 = sbr.rel (%p143) target = $region20
      $region19: #{batch_net_forward.5} parent=11 // pred_region
        _
      $region20: #{batch_net_forward.5} parent=11 // pred_fallthru
        _
      // Predicated region
      $region21: #{batch_net_forward.5} parent=11 // pred_check
        %p146 = pneg %p99
      $region22: #{batch_net_forward.5} parent=11 // pred_check_branch
        %148 = sbr.rel (%p146) target = $region24
      $region23: #{batch_net_forward.5} parent=11 // pred_region
        _
      $region24: #{batch_net_forward.5} parent=11 // pred_fallthru
        _
    $region12: #{batch_net_forward.5} parent=5 // pred_fallthru
      _
    %p149 = scmp.lt.s32.totalorder %s10, 4
    // Predicated region
    $region25: #{batch_net_forward.5} parent=5 // pred_check
      %p150 = pneg %p149
    $region26: #{batch_net_forward.5} parent=5 // pred_check_branch
      %152 = sbr.rel (%p150) target = $region28
    $region27: #{batch_net_forward.5} parent=5 // pred_region
      // Predicated region
      $region29: #{batch_net_forward.5} parent=27 // pred_check
        %p153 = pneg %p30
      $region30: #{batch_net_forward.5} parent=27 // pred_check_branch
        %155 = sbr.rel (%p153) target = $region32
      $region31: #{batch_net_forward.5} parent=27 // pred_region
        %s156 = smul.u32 8, %s10
        %p157 = scmp.lt.s32.totalorder %s156, 31
        %s158 = scalar_select %p157, %s156, 31
        %s159 = smul.addr %s158, 8
        %s160 = scalar_lea.vmem %s0, %s159
        %s161 = smul.u32 8, %s10
      $region32: #{batch_net_forward.5} parent=27 // pred_fallthru
        _
    $region28: #{batch_net_forward.5} parent=5 // pred_fallthru
      _
    %p162 = scmp.le.s32.totalorder 1, %s10
    %p163 = scmp.lt.s32.totalorder %s10, 5
    %p164 = pnand %p162, %p163
    %p165 = pneg %p164
    // Predicated region
    $region33: #{batch_net_forward.5} parent=5 // pred_check
      _
    $region34: #{batch_net_forward.5} parent=5 // pred_check_branch
      %167 = sbr.rel (%p164) target = $region36
    $region35: #{batch_net_forward.5} parent=5 // pred_region
      %s168 = ssub.s32 %s10, 1
      %s169 = smul.u32 8, %s15
      %p170 = scmp.lt.s32.totalorder %s169, 31
      %s171 = scalar_select %p170, %s169, 31
      %s172 = smul.addr %s171, 8
      %s173 = scalar_lea.vmem %s0, %s172
      %p174 = pneg %p36
      %p175 = pneg %p33
      %p176 = pneg %p57
      %p177 = pneg %p54
      %p178 = pneg %p78
      %p179 = pneg %p75
      %p180 = pneg %p99
      %p181 = pneg %p96
      %p182 = pneg %p125
      %p183 = pneg %p122
      %s184 = smul.u32 8, %s15
      %p185 = scmp.lt.s32.totalorder %s184, 31
      %s186 = scalar_select %p185, %s184, 31
      %s187 = smul.addr %s186, 8
      %s188 = scalar_lea.vmem %s4, %s187
      %s189 = smul.u32 8, %s15
      %p190 = scmp.lt.s32.totalorder %s189, 31
      %s191 = scalar_select %p190, %s189, 31
      %s192 = smul.addr %s191, 8
      %s193 = scalar_lea.vmem %s0, %s192
      %s194 = smul.u32 8, %s15
      %s195 = smul.u32 8, %s15
      %p196 = scmp.lt.s32.totalorder %s195, 31
      %s197 = scalar_select %p196, %s195, 31
      %s198 = smul.addr %s197, 8
      %s199 = scalar_lea.vmem %s4, %s198
      %s200 = smul.u32 8, %s15
      %v201 = vld [vmem:[%s193] sm:$0xff]
      %v202 = vld [vmem:[%s193 + $0x8] sm:$0xff]
      %v203 = vld [vmem:[%s193 + $0x10] sm:$0xff]
      %v204 = vld [vmem:[%s193 + $0x18] sm:$0xff]
      %v205 = vld [vmem:[%s193 + $0x20] sm:$0xff]
      %v206 = vld [vmem:[%s193 + $0x28] sm:$0xff]
      %v207 = vld [vmem:[%s193 + $0x30] sm:$0xff]
      %v208 = vld [vmem:[%s193 + $0x38] sm:$0xff]
      %v209 = vld [vmem:[%s1] sm:$0x1]
      %v210 = vlaneseq
      %v211 = vshrl.u32 %v210, 7
      %v212 = vsub.s32 0, %v211
      %v213 = vrot.slane %v209, %v212
      %v214 = vmul.f32 %v201, %v213
      %v215 = vmul.f32 %v202, %v213
      %v216 = vmul.f32 %v203, %v213
      %v217 = vmul.f32 %v204, %v213
      %v218 = vmul.f32 %v205, %v213
      %v219 = vmul.f32 %v206, %v213
      %v220 = vmul.f32 %v207, %v213
      %v221 = vmul.f32 %v208, %v213
      %v222 = vld [vmem:[%s1 + $0x1] sm:$0x1]
      %v223 = vlaneseq
      %v224 = vshrl.u32 %v223, 7
      %v225 = vsub.s32 0, %v224
      %v226 = vrot.slane %v222, %v225
      %v227 = vadd.f32 %v214, %v226
      %v228 = vadd.f32 %v215, %v226
      %v229 = vadd.f32 %v216, %v226
      %v230 = vadd.f32 %v217, %v226
      %v231 = vadd.f32 %v218, %v226
      %v232 = vadd.f32 %v219, %v226
      %v233 = vadd.f32 %v220, %v226
      %v234 = vadd.f32 %v221, %v226
      %v235 = vmax.f32 %v227, 0.0
      %v236 = vmax.f32 %v228, 0.0
      %v237 = vmax.f32 %v229, 0.0
      %v238 = vmax.f32 %v230, 0.0
      %v239 = vmax.f32 %v231, 0.0
      %v240 = vmax.f32 %v232, 0.0
      %v241 = vmax.f32 %v233, 0.0
      %v242 = vmax.f32 %v234, 0.0
      %v243 = vld [vmem:[%s2] sm:$0xff]
      %v244 = vld [vmem:[%s2 + $0x8] sm:$0xff]
      %v245 = vld [vmem:[%s2 + $0x10] sm:$0xff]
      %v246 = vld [vmem:[%s2 + $0x18] sm:$0xff]
      %v247 = vld [vmem:[%s2 + $0x20] sm:$0xff]
      %v248 = vld [vmem:[%s2 + $0x28] sm:$0xff]
      %v249 = vld [vmem:[%s2 + $0x30] sm:$0xff]
      %v250 = vld [vmem:[%s2 + $0x38] sm:$0xff]
      %v251 = vld [vmem:[%s2 + $0x40] sm:$0xff]
      %v252 = vld [vmem:[%s2 + $0x48] sm:$0xff]
      %v253 = vld [vmem:[%s2 + $0x50] sm:$0xff]
      %v254 = vld [vmem:[%s2 + $0x58] sm:$0xff]
      %v255 = vld [vmem:[%s2 + $0x60] sm:$0xff]
      %v256 = vld [vmem:[%s2 + $0x68] sm:$0xff]
      %v257 = vld [vmem:[%s2 + $0x70] sm:$0xff]
      %v258 = vld [vmem:[%s2 + $0x78] sm:$0xff]
      %v259 = vld [vmem:[%s3] sm:$0x1]
      %v261 = vlaneseq
      %v262 = vshrl.u32 %v261, 7
      %v263 = vsub.s32 0, %v262
      %v264 = vrot.slane %v259, %v263
      %266 = vmatprep.subr.mxu0 0.0
      %267 = vmatpush1.msra.mxu0 %v243
      %268 = vmatprep.subr.mxu0 0.0
      %269 = vmatpush1.msra.mxu0 %v244
      %270 = vmatprep.subr.mxu0 0.0
      %271 = vmatpush1.msra.mxu0 %v245
      %272 = vmatprep.subr.mxu0 0.0
      %273 = vmatpush1.msra.mxu0 %v246
      %274 = vmatprep.subr.mxu0 0.0
      %275 = vmatpush1.msra.mxu0 %v247
      %276 = vmatprep.subr.mxu0 0.0
      %277 = vmatpush1.msra.mxu0 %v248
      %278 = vmatprep.subr.mxu0 0.0
      %279 = vmatpush1.msra.mxu0 %v249
      %280 = vmatprep.subr.mxu0 0.0
      %281 = vmatpush1.msra.mxu0 %v250
      %282 = vmatprep.subr.mxu0 0.0
      %283 = vmatpush1.msra.mxu0 %v251
      %284 = vmatprep.subr.mxu0 0.0
      %285 = vmatpush1.msra.mxu0 %v252
      %286 = vmatprep.subr.mxu0 0.0
      %287 = vmatpush1.msra.mxu0 %v253
      %288 = vmatprep.subr.mxu0 0.0
      %289 = vmatpush1.msra.mxu0 %v254
      %290 = vmatprep.subr.mxu0 0.0
      %291 = vmatpush1.msra.mxu0 %v255
      %292 = vmatprep.subr.mxu0 0.0
      %293 = vmatpush1.msra.mxu0 %v256
      %294 = vmatprep.subr.mxu0 0.0
      %295 = vmatpush1.msra.mxu0 %v257
      %296 = vmatprep.subr.mxu0 0.0
      %297 = vmatpush1.msra.mxu0 %v258
      %298 = vmatprep.subr.mxu0 0.0
      %299 = vmatpush1.msra.mxu0 0.0
      %300 = vmatprep.subr.mxu0 0.0
      %301 = vmatpush1.msra.mxu0 0.0
      %302 = vmatprep.subr.mxu0 0.0
      %303 = vmatpush1.msra.mxu0 0.0
      %304 = vmatprep.subr.mxu0 0.0
      %305 = vmatpush1.msra.mxu0 0.0
      %306 = vmatprep.subr.mxu0 0.0
      %307 = vmatpush1.msra.mxu0 0.0
      %308 = vmatprep.subr.mxu0 0.0
      %309 = vmatpush1.msra.mxu0 0.0
      %310 = vmatprep.subr.mxu0 0.0
      %311 = vmatpush1.msra.mxu0 0.0
      %312 = vmatprep.subr.mxu0 0.0
      %313 = vmatpush1.msra.mxu0 0.0
      %314 = vmatprep.subr.mxu0 0.0
      %315 = vmatpush1.msra.mxu0 0.0
      %316 = vmatprep.subr.mxu0 0.0
      %317 = vmatpush1.msra.mxu0 0.0
      %318 = vmatprep.subr.mxu0 0.0
      %319 = vmatpush1.msra.mxu0 0.0
      %320 = vmatprep.subr.mxu0 0.0
      %321 = vmatpush1.msra.mxu0 0.0
      %322 = vmatprep.subr.mxu0 0.0
      %323 = vmatpush1.msra.mxu0 0.0
      %324 = vmatprep.subr.mxu0 0.0
      %325 = vmatpush1.msra.mxu0 0.0
      %326 = vmatprep.subr.mxu0 0.0
      %327 = vmatpush1.msra.mxu0 0.0
      %328 = vmatprep.subr.mxu0 0.0
      %329 = vmatpush1.msra.mxu0 0.0
      %330 = vmatprep.mubr.f32.mxu0 0.0
      %331 = vmatmul.mubr.f32.gmra.mrb[0].mxu0 %v235
      %v332 = vpop.f32.mrb[0].mxu0
      %v333 = vadd.f32 %v264, %v332
      %v334 = vpop.f32.mrb[0].mxu0
      %335 = vmatprep.mubr.f32.mxu0 0.0
      %336 = vmatmul.mubr.f32.gmra.mrb[0].mxu0 %v236
      %v337 = vpop.f32.mrb[0].mxu0
      %v338 = vadd.f32 %v264, %v337
      %v339 = vpop.f32.mrb[0].mxu0
      %340 = vmatprep.mubr.f32.mxu0 0.0
      %341 = vmatmul.mubr.f32.gmra.mrb[0].mxu0 %v237
      %v342 = vpop.f32.mrb[0].mxu0
      %v343 = vadd.f32 %v264, %v342
      %v344 = vpop.f32.mrb[0].mxu0
      %345 = vmatprep.mubr.f32.mxu0 0.0
      %346 = vmatmul.mubr.f32.gmra.mrb[0].mxu0 %v238
      %v347 = vpop.f32.mrb[0].mxu0
      %v348 = vadd.f32 %v264, %v347
      %v349 = vpop.f32.mrb[0].mxu0
      %350 = vmatprep.mubr.f32.mxu0 0.0
      %351 = vmatmul.mubr.f32.gmra.mrb[0].mxu0 %v239
      %v352 = vpop.f32.mrb[0].mxu0
      %v353 = vadd.f32 %v264, %v352
      %v354 = vpop.f32.mrb[0].mxu0
      %355 = vmatprep.mubr.f32.mxu0 0.0
      %356 = vmatmul.mubr.f32.gmra.mrb[0].mxu0 %v240
      %v357 = vpop.f32.mrb[0].mxu0
      %v358 = vadd.f32 %v264, %v357
      %v359 = vpop.f32.mrb[0].mxu0
      %360 = vmatprep.mubr.f32.mxu0 0.0
      %361 = vmatmul.mubr.f32.gmra.mrb[0].mxu0 %v241
      %v362 = vpop.f32.mrb[0].mxu0
      %v363 = vadd.f32 %v264, %v362
      %v364 = vpop.f32.mrb[0].mxu0
      %365 = vmatprep.mubr.f32.mxu0 0.0
      %366 = vmatmul.mubr.f32.gmra.mrb[0].mxu0 %v242
      %v367 = vpop.f32.mrb[0].mxu0
      %v368 = vadd.f32 %v264, %v367
      %v369 = vpop.f32.mrb[0].mxu0
      %370 = vdwg.mxu0
      %371 = vst [vmem:[%s199] sm:$0xff] %v333
      %372 = vst [vmem:[%s199 + $0x8] sm:$0xff] %v338
      %373 = vst [vmem:[%s199 + $0x10] sm:$0xff] %v343
      %374 = vst [vmem:[%s199 + $0x18] sm:$0xff] %v348
      %375 = vst [vmem:[%s199 + $0x20] sm:$0xff] %v353
      %376 = vst [vmem:[%s199 + $0x28] sm:$0xff] %v358
      %377 = vst [vmem:[%s199 + $0x30] sm:$0xff] %v363
      %378 = vst [vmem:[%s199 + $0x38] sm:$0xff] %v368
      %s379 = smul.u32 8, %s15
      %p380 = scmp.lt.s32.totalorder %s379, 31
      %s381 = scalar_select %p380, %s379, 31
      %s382 = smul.addr %s381, 8
      %s383 = scalar_lea.vmem %s4, %s382
      // Predicated region
      $region37: #{batch_net_forward.5} parent=35 // pred_check
        %p384 = pneg %p122
      $region38: #{batch_net_forward.5} parent=35 // pred_check_branch
        %386 = sbr.rel (%p384) target = $region40
      $region39: #{batch_net_forward.5} parent=35 // pred_region
        %s387 = smul.u32 8, %s15
      $region40: #{batch_net_forward.5} parent=35 // pred_fallthru
        _
    $region36: #{batch_net_forward.5} parent=5 // pred_fallthru
      _
    %p388 = scmp.le.s32.totalorder 2, %s10
    // Predicated region
    $region41: #{batch_net_forward.5} parent=5 // pred_check
      %p389 = pneg %p388
    $region42: #{batch_net_forward.5} parent=5 // pred_check_branch
      %391 = sbr.rel (%p389) target = $region44
    $region43: #{batch_net_forward.5} parent=5 // pred_region
      %s392 = ssub.s32 %s10, 2
      // Predicated region
      $region45: #{batch_net_forward.5} parent=43 // pred_check
        %p393 = pneg %p128
      $region46: #{batch_net_forward.5} parent=43 // pred_check_branch
        %395 = sbr.rel (%p393) target = $region48
      $region47: #{batch_net_forward.5} parent=43 // pred_region
        %s396 = smul.u32 8, %s16
        %p397 = scmp.lt.s32.totalorder %s396, 31
        %s398 = scalar_select %p397, %s396, 31
        %s399 = smul.addr %s398, 8
        %s400 = scalar_lea.vmem %s4, %s399
      $region48: #{batch_net_forward.5} parent=43 // pred_fallthru
        _
    $region44: #{batch_net_forward.5} parent=5 // pred_fallthru
      _
  $region6: #{batch_net_forward.5} parent=0 // loop_footer
    %s14 = sadd.s32 1, %s10
  $region7: #{batch_net_forward.5} parent=0 // loop_footer_branch
    %9 = sbr.rel target = $region3
  $region8: #{batch_net_forward.5} parent=0 // loop_exit
    _

</llo_original>
